<compile_context>
chip_gen: v7x
topology: tpu7x:2x2x1
jax: 0.10.0
libtpu: 0.0.40
codegen_flags: <defaults>
</compile_context>

<pallas_src>
import numpy as np
import jax
import jax.numpy as jnp
from jax.experimental import pallas as pl
from jax.experimental.pallas import tpu as pltpu

D_IN = 151      # hard-coded in Network_selector (Linear 151 -> 151)
D_R = 2000      # hard-coded by .repeat(1, 2000) / kern column count
PAD_IN = 256    # 151 padded to a multiple of 128 (lane-dense)
PAD_R = 2048    # 2000 padded to a multiple of 128 (lane-dense)
TK = 512        # spectral columns streamed per grid step
NR = PAD_R // TK  # 4 grid steps


# ---------------------------------------------------------------------------
# Fused kernel: selector MLP (once) + chunked spectral reconstruction.
# Zero padding is preserved through tanh (tanh(0)=0) and the matmuls, so
# padded lanes carry values that are sliced away in the wrapper.
# ---------------------------------------------------------------------------
def fused_kernel(x_ref, w1_ref, b1_ref, w2_ref, b2_ref, w3_ref, b3_ref,
                 ut_ref, kt_ref,
                 ehat_ref, rhat_ref, sel_ref):
    k = pl.program_id(0)

    @pl.when(k == 0)
    def _init():
        x = x_ref[...]                                           # (B, 256) f32
        h1 = jnp.tanh(
            jnp.dot(x.astype(jnp.bfloat16), w1_ref[...],
                    preferred_element_type=jnp.float32) + b1_ref[...])
        h2 = jnp.tanh(
            jnp.dot(h1.astype(jnp.bfloat16), w2_ref[...],
                    preferred_element_type=jnp.float32) + b2_ref[...]) + h1
        select = (jnp.dot(h2.astype(jnp.bfloat16), w3_ref[...],
                          preferred_element_type=jnp.float32)
                  + b3_ref[...] + h2)                            # (B, 256) f32
        sel_ref[...] = select.astype(jnp.bfloat16)
        ehat_ref[...] = jnp.zeros_like(ehat_ref)

    # --- spectral reconstruction, one 512-wide chunk of U^T / kern^T ---
    # TODO(synk): no f64 on TPU; f32 exp may over/under-flow where the f64
    #             torch reference does not.
    rhat0_chunk = jnp.exp(
        jnp.dot(sel_ref[...], ut_ref[...],
                preferred_element_type=jnp.float32))             # (B, TK) f32
    ehat_ref[...] += jnp.dot(rhat0_chunk.astype(jnp.bfloat16), kt_ref[...],
                             preferred_element_type=jnp.float32)  # (B, 256)
    rhat_ref[k] = rhat0_chunk          # leading-dim dynamic index (untiled dim)

    @pl.when(k == pl.num_programs(0) - 1)
    def _finalize():
        # Rhat = Rhat0 / Ehat0[:,0:1];  Ehat = Rhat @ kern^T == Ehat0 / Ehat0[:,0:1]
        inv = 1.0 / ehat_ref[:, 0:1]                             # (B, 1)
        rhat_ref[...] = rhat_ref[...] * inv                      # (NR,B,TK)*(B,1)
        ehat_ref[...] = ehat_ref[...] * inv


# ---------------------------------------------------------------------------
# Wrapper: one jit, one pallas_call.  Weights/x use constant index maps (DMA'd
# once, VMEM-resident); only the ut/kt chunks advance with the grid so their
# DMA overlaps compute.
# ---------------------------------------------------------------------------
@jax.jit
def network_forward(params, x, sigma, key):
    """Reproduces Network.forward(x, sigma) ->
    (Ehat, Rhat, Ehat_N, Rhat_N, x_batch_N)."""
    w1t, b1, w2t, b2, w3t, b3, ut, kt = params
    x = x.astype(jnp.float32)
    B = x.shape[0]                                               # B=8 sublane-aligned

    x_pad = jnp.zeros((B, PAD_IN), jnp.float32).at[:, :D_IN].set(x)

    flops = 2 * B * (3 * PAD_IN * PAD_IN + 2 * PAD_IN * PAD_R)
    transcendentals = B * (PAD_R + 2 * PAD_IN)
    bytes_accessed = ((3 * PAD_IN * PAD_IN + 2 * PAD_IN * PAD_R) * 2   # bf16 weights
                      + (3 * PAD_IN + B * PAD_IN) * 4                  # biases + x
                      + (B * PAD_IN + NR * B * TK) * 4)                # outputs

    ehat_p, rhat_3d = pl.pallas_call(
        fused_kernel,
        out_shape=(jax.ShapeDtypeStruct((B, PAD_IN), jnp.float32),
                   jax.ShapeDtypeStruct((NR, B, TK), jnp.float32)),
        grid_spec=pltpu.PrefetchScalarGridSpec(
            num_scalar_prefetch=0,
            grid=(NR,),
            in_specs=[
                pl.BlockSpec((B, PAD_IN), lambda k: (0, 0)),        # x (resident)
                pl.BlockSpec((PAD_IN, PAD_IN), lambda k: (0, 0)),   # W1^T
                pl.BlockSpec((1, PAD_IN), lambda k: (0, 0)),        # b1
                pl.BlockSpec((PAD_IN, PAD_IN), lambda k: (0, 0)),   # W2^T
                pl.BlockSpec((1, PAD_IN), lambda k: (0, 0)),        # b2
                pl.BlockSpec((PAD_IN, PAD_IN), lambda k: (0, 0)),   # W3^T
                pl.BlockSpec((1, PAD_IN), lambda k: (0, 0)),        # b3
                pl.BlockSpec((PAD_IN, TK), lambda k: (0, k)),       # U^T chunk
                pl.BlockSpec((TK, PAD_IN), lambda k: (k, 0)),       # kern^T chunk
            ],
            out_specs=(pl.BlockSpec((B, PAD_IN), lambda k: (0, 0)),     # Ehat (resident acc)
                       pl.BlockSpec((NR, B, TK), lambda k: (0, 0, 0))),  # Rhat chunks (resident)
            scratch_shapes=[pltpu.VMEM((B, PAD_IN), jnp.bfloat16)],      # select
        ),
        compiler_params=pltpu.CompilerParams(
            dimension_semantics=("arbitrary",)),
        cost_estimate=pl.CostEstimate(flops=flops,
                                      transcendentals=transcendentals,
                                      bytes_accessed=bytes_accessed),
    )(x_pad, w1t, b1, w2t, b2, w3t, b3, ut, kt)

    ehat = ehat_p[:, :D_IN]
    rhat = jnp.transpose(rhat_3d, (1, 0, 2)).reshape(B, PAD_R)[:, :D_R]

    # x_batch_N = x + sigma * U[0,1).  Generated in the wrapper (the in-kernel
    # hardware PRNG pltpu.prng_* has no CPU/interpret lowering); bytes are tiny.
    noise = jax.random.uniform(key, x.shape, jnp.float32)
    x_batch_n = x + jnp.asarray(sigma, jnp.float32) * noise

    # "_N" branch of the torch code reruns the selector on the SAME x and
    # computes Ehat_N from the primary (scaled) Rhat, so Ehat_N/Rhat_N are
    # identical to Ehat/Rhat -> return aliases instead of recomputing.
    return ehat, rhat, ehat, rhat, x_batch_n


# ---------------------------------------------------------------------------
# Deterministic parameter / kernel-matrix construction (zero-padded once,
# weights stored in bf16, biases in f32).
# ---------------------------------------------------------------------------
def make_params(key):
    keys = jax.random.split(key, 6)
    bound = 1.0 / np.sqrt(D_IN)     # matches nn.Linear default init range

    def lin(kw, kb):
        w = jax.random.uniform(kw, (D_IN, D_IN), jnp.float32, -bound, bound)
        b = jax.random.uniform(kb, (1, D_IN), jnp.float32, -bound, bound)
        wt = (jnp.zeros((PAD_IN, PAD_IN), jnp.float32)
              .at[:D_IN, :D_IN].set(w.T).astype(jnp.bfloat16))   # x @ W^T form
        bp = jnp.zeros((1, PAD_IN), jnp.float32).at[:, :D_IN].set(b)
        return wt, bp

    w1t, b1 = lin(keys[0], keys[1])
    w2t, b2 = lin(keys[2], keys[3])
    w3t, b3 = lin(keys[4], keys[5])

    # Synthetic Laplace-like kernel  kern[i, j] = exp(-tau_i * omega_j) * d_omega
    tau = np.linspace(0.0, 1.0, D_IN, dtype=np.float64)
    omega = np.linspace(0.0, 20.0, D_R, dtype=np.float64)
    kern = np.exp(-np.outer(tau, omega)) * (omega[1] - omega[0])   # (151, 2000)

    # torch.svd(kern) -> (u, s, v) with kern = u @ diag(s) @ v^T ; self.U = v.
    # Forward uses U.transpose(0,1) = v^T, which is numpy's `vh`.
    _, _, vh = np.linalg.svd(kern, full_matrices=False)            # (151, 2000)

    ut = np.zeros((PAD_IN, PAD_R), np.float32)
    ut[:D_IN, :D_R] = vh                                           # U^T, padded
    kt = np.zeros((PAD_R, PAD_IN), np.float32)
    kt[:D_R, :D_IN] = kern.T                                       # kern^T, padded

    return (w1t, b1, w2t, b2, w3t, b3,
            jnp.asarray(ut, jnp.bfloat16), jnp.asarray(kt, jnp.bfloat16))


# Pure-JAX reference (literal torch math, incl. the second kern matmul), with
# the same bf16 weights / activation casts, for a correctness check of the
# fused / chunked / algebraically-simplified kernel.
def _reference(params, x):
    w1t, b1, w2t, b2, w3t, b3, ut, kt = params
    B = x.shape[0]
    f32 = jnp.float32
    xp = jnp.zeros((B, PAD_IN), f32).at[:, :D_IN].set(x)
    h1 = jnp.tanh(jnp.dot(xp.astype(jnp.bfloat16), w1t, preferred_element_type=f32) + b1)
    h2 = jnp.tanh(jnp.dot(h1.astype(jnp.bfloat16), w2t, preferred_element_type=f32) + b2) + h1
    sel = jnp.dot(h2.astype(jnp.bfloat16), w3t, preferred_element_type=f32) + b3 + h2
    rhat0 = jnp.exp(jnp.dot(sel.astype(jnp.bfloat16), ut, preferred_element_type=f32))
    ehat0 = jnp.dot(rhat0.astype(jnp.bfloat16), kt, preferred_element_type=f32)
    corr = ehat0[:, 0:1]
    rhat = rhat0 / corr
    ehat = jnp.dot(rhat.astype(jnp.bfloat16), kt, preferred_element_type=f32)  # literal 2nd matmul
    return ehat[:, :D_IN], rhat[:, :D_R]


if __name__ == "__main__":
    key = jax.random.PRNGKey(0)
    pkey, xkey, nkey = jax.random.split(key, 3)

    params = make_params(pkey)

    B = 8
    x = 0.1 * jax.random.normal(xkey, (B, D_IN), dtype=jnp.float32)
    sigma = 1e-4

    outs = network_forward(params, x, sigma, nkey)
    outs = jax.block_until_ready(outs)
    ehat, rhat, ehat_n, rhat_n, x_batch_n = outs

    assert ehat.shape == (B, D_IN)
    assert rhat.shape == (B, D_R)
    assert ehat_n.shape == (B, D_IN)
    assert rhat_n.shape == (B, D_R)
    assert x_batch_n.shape == (B, D_IN)
    assert bool(jnp.all(jnp.isfinite(ehat))) and bool(jnp.all(jnp.isfinite(rhat)))
    assert bool(jnp.all(jnp.isfinite(x_batch_n)))
    # noise stays within [x, x + sigma)
    assert bool(jnp.all(x_batch_n >= x - 1e-7))
    assert bool(jnp.all(x_batch_n <= x + sigma + 1e-7))

    ehat_expect, rhat_expect = _reference(params, x)
    # bf16 weights => looser tolerance than the old all-f32 version.
    np.testing.assert_allclose(np.asarray(ehat), np.asarray(ehat_expect),
                               rtol=2e-2, atol=1e-4)
    np.testing.assert_allclose(np.asarray(rhat), np.asarray(rhat_expect),
                               rtol=2e-2, atol=1e-4)

    print("KERNEL_OK")
</pallas_src>

<mosaic_0001>
module attributes {stable_mosaic.version = 11 : i64} {
  func.func @fused_kernel(%arg0: i32, %arg1: memref<8x256xf32, #tpu.memory_space<vmem>>, %arg2: memref<256x256xbf16, #tpu.memory_space<vmem>>, %arg3: memref<1x256xf32, #tpu.memory_space<vmem>>, %arg4: memref<256x256xbf16, #tpu.memory_space<vmem>>, %arg5: memref<1x256xf32, #tpu.memory_space<vmem>>, %arg6: memref<256x256xbf16, #tpu.memory_space<vmem>>, %arg7: memref<1x256xf32, #tpu.memory_space<vmem>>, %arg8: memref<256x512xbf16, #tpu.memory_space<vmem>>, %arg9: memref<512x256xbf16, #tpu.memory_space<vmem>>, %arg10: memref<8x256xf32, #tpu.memory_space<vmem>>, %arg11: memref<4x8x512xf32, #tpu.memory_space<vmem>>, %arg12: memref<8x256xbf16, #tpu.memory_space<vmem>>) attributes {dimension_semantics = [#tpu.dimension_semantics<arbitrary>], iteration_bounds = array<i64: 4>, scalar_prefetch = 0 : i64, scratch_operands = 1 : i64, tpu.core_type = #tpu.core_type<tc>, window_params = [{pipeline_mode = #tpu.pipeline_mode<synchronous>, transform_indices = @transform_0, window_bounds = array<i64: 8, 256>}, {pipeline_mode = #tpu.pipeline_mode<synchronous>, transform_indices = @transform_1, window_bounds = array<i64: 256, 256>}, {pipeline_mode = #tpu.pipeline_mode<synchronous>, transform_indices = @transform_2, window_bounds = array<i64: 1, 256>}, {pipeline_mode = #tpu.pipeline_mode<synchronous>, transform_indices = @transform_3, window_bounds = array<i64: 256, 256>}, {pipeline_mode = #tpu.pipeline_mode<synchronous>, transform_indices = @transform_4, window_bounds = array<i64: 1, 256>}, {pipeline_mode = #tpu.pipeline_mode<synchronous>, transform_indices = @transform_5, window_bounds = array<i64: 256, 256>}, {pipeline_mode = #tpu.pipeline_mode<synchronous>, transform_indices = @transform_6, window_bounds = array<i64: 1, 256>}, {transform_indices = @transform_7, window_bounds = array<i64: 256, 512>}, {transform_indices = @transform_8, window_bounds = array<i64: 512, 256>}, {pipeline_mode = #tpu.pipeline_mode<synchronous>, transform_indices = @transform_9, window_bounds = array<i64: 8, 256>}, {pipeline_mode = #tpu.pipeline_mode<synchronous>, transform_indices = @transform_10, window_bounds = array<i64: 4, 8, 512>}]} {
    %c0_i32 = arith.constant 0 : i32
    %0 = arith.cmpi eq, %arg0, %c0_i32 : i32
    %1 = arith.extui %0 : i1 to i32
    %c0_i32_0 = arith.constant 0 : i32
    %2 = arith.cmpi ne, %1, %c0_i32_0 : i32
    scf.if %2 {
      %c0_14 = arith.constant 0 : index
      %c0_15 = arith.constant 0 : index
      %20 = vector.load %arg1[%c0_14, %c0_15] : memref<8x256xf32, #tpu.memory_space<vmem>>, vector<8x256xf32>
      %21 = arith.truncf %20 : vector<8x256xf32> to vector<8x256xbf16>
      %c0_16 = arith.constant 0 : index
      %c0_17 = arith.constant 0 : index
      %22 = vector.load %arg2[%c0_16, %c0_17] : memref<256x256xbf16, #tpu.memory_space<vmem>>, vector<256x256xbf16>
      %cst_18 = arith.constant dense<0.000000e+00> : vector<8x256xf32>
      %23 = tpu.matmul %21, %22, %cst_18 {dimension_numbers = #tpu.dot_dimension_numbers<[1], [0], [0], [1], [0, 0, 1, 1], [], []>} : vector<8x256xbf16>, vector<256x256xbf16>, vector<8x256xf32> -> vector<8x256xf32>
      %c0_19 = arith.constant 0 : index
      %c0_20 = arith.constant 0 : index
      %24 = vector.load %arg3[%c0_19, %c0_20] : memref<1x256xf32, #tpu.memory_space<vmem>>, vector<1x256xf32>
      %25 = vector.broadcast %24 : vector<1x256xf32> to vector<8x256xf32>
      %26 = arith.addf %23, %25 : vector<8x256xf32>
      %27 = math.tanh %26 : vector<8x256xf32>
      %28 = arith.truncf %27 : vector<8x256xf32> to vector<8x256xbf16>
      %c0_21 = arith.constant 0 : index
      %c0_22 = arith.constant 0 : index
      %29 = vector.load %arg4[%c0_21, %c0_22] : memref<256x256xbf16, #tpu.memory_space<vmem>>, vector<256x256xbf16>
      %cst_23 = arith.constant dense<0.000000e+00> : vector<8x256xf32>
      %30 = tpu.matmul %28, %29, %cst_23 {dimension_numbers = #tpu.dot_dimension_numbers<[1], [0], [0], [1], [0, 0, 1, 1], [], []>} : vector<8x256xbf16>, vector<256x256xbf16>, vector<8x256xf32> -> vector<8x256xf32>
      %c0_24 = arith.constant 0 : index
      %c0_25 = arith.constant 0 : index
      %31 = vector.load %arg5[%c0_24, %c0_25] : memref<1x256xf32, #tpu.memory_space<vmem>>, vector<1x256xf32>
      %32 = vector.broadcast %31 : vector<1x256xf32> to vector<8x256xf32>
      %33 = arith.addf %30, %32 : vector<8x256xf32>
      %34 = math.tanh %33 : vector<8x256xf32>
      %35 = arith.addf %34, %27 : vector<8x256xf32>
      %36 = arith.truncf %35 : vector<8x256xf32> to vector<8x256xbf16>
      %c0_26 = arith.constant 0 : index
      %c0_27 = arith.constant 0 : index
      %37 = vector.load %arg6[%c0_26, %c0_27] : memref<256x256xbf16, #tpu.memory_space<vmem>>, vector<256x256xbf16>
      %cst_28 = arith.constant dense<0.000000e+00> : vector<8x256xf32>
      %38 = tpu.matmul %36, %37, %cst_28 {dimension_numbers = #tpu.dot_dimension_numbers<[1], [0], [0], [1], [0, 0, 1, 1], [], []>} : vector<8x256xbf16>, vector<256x256xbf16>, vector<8x256xf32> -> vector<8x256xf32>
      %c0_29 = arith.constant 0 : index
      %c0_30 = arith.constant 0 : index
      %39 = vector.load %arg7[%c0_29, %c0_30] : memref<1x256xf32, #tpu.memory_space<vmem>>, vector<1x256xf32>
      %40 = vector.broadcast %39 : vector<1x256xf32> to vector<8x256xf32>
      %41 = arith.addf %38, %40 : vector<8x256xf32>
      %42 = arith.addf %41, %35 : vector<8x256xf32>
      %43 = arith.truncf %42 : vector<8x256xf32> to vector<8x256xbf16>
      %c0_31 = arith.constant 0 : index
      %c0_32 = arith.constant 0 : index
      %44 = vector.load %arg12[%c0_31, %c0_32] : memref<8x256xbf16, #tpu.memory_space<vmem>>, vector<8x256xbf16>
      tpu.vector_store %arg12[%c0_31, %c0_32], %43 {strides = array<i32>} : memref<8x256xbf16, #tpu.memory_space<vmem>>, vector<8x256xbf16>,
      %cst_33 = arith.constant 0.000000e+00 : f32
      %45 = vector.broadcast %cst_33 : f32 to vector<8x256xf32>
      %c0_34 = arith.constant 0 : index
      %c0_35 = arith.constant 0 : index
      %46 = vector.load %arg10[%c0_34, %c0_35] : memref<8x256xf32, #tpu.memory_space<vmem>>, vector<8x256xf32>
      tpu.vector_store %arg10[%c0_34, %c0_35], %45 {strides = array<i32>} : memref<8x256xf32, #tpu.memory_space<vmem>>, vector<8x256xf32>,
    } else {
    }
    %c0 = arith.constant 0 : index
    %c0_1 = arith.constant 0 : index
    %3 = vector.load %arg12[%c0, %c0_1] : memref<8x256xbf16, #tpu.memory_space<vmem>>, vector<8x256xbf16>
    %c0_2 = arith.constant 0 : index
    %c0_3 = arith.constant 0 : index
    %4 = vector.load %arg8[%c0_2, %c0_3] : memref<256x512xbf16, #tpu.memory_space<vmem>>, vector<256x512xbf16>
    %cst = arith.constant dense<0.000000e+00> : vector<8x512xf32>
    %5 = tpu.matmul %3, %4, %cst {dimension_numbers = #tpu.dot_dimension_numbers<[1], [0], [0], [1], [0, 0, 1, 1], [], []>} : vector<8x256xbf16>, vector<256x512xbf16>, vector<8x512xf32> -> vector<8x512xf32>
    %6 = math.exp %5 : vector<8x512xf32>
    %c0_4 = arith.constant 0 : index
    %c0_5 = arith.constant 0 : index
    %7 = vector.load %arg10[%c0_4, %c0_5] : memref<8x256xf32, #tpu.memory_space<vmem>>, vector<8x256xf32>
    %8 = arith.truncf %6 : vector<8x512xf32> to vector<8x512xbf16>
    %c0_6 = arith.constant 0 : index
    %c0_7 = arith.constant 0 : index
    %9 = vector.load %arg9[%c0_6, %c0_7] : memref<512x256xbf16, #tpu.memory_space<vmem>>, vector<512x256xbf16>
    %cst_8 = arith.constant dense<0.000000e+00> : vector<8x256xf32>
    %10 = tpu.matmul %8, %9, %cst_8 {dimension_numbers = #tpu.dot_dimension_numbers<[1], [0], [0], [1], [0, 0, 1, 1], [], []>} : vector<8x512xbf16>, vector<512x256xbf16>, vector<8x256xf32> -> vector<8x256xf32>
    %11 = arith.addf %7, %10 : vector<8x256xf32>
    %c0_9 = arith.constant 0 : index
    %c0_10 = arith.constant 0 : index
    %12 = vector.load %arg10[%c0_9, %c0_10] : memref<8x256xf32, #tpu.memory_space<vmem>>, vector<8x256xf32>
    tpu.vector_store %arg10[%c0_9, %c0_10], %11 {strides = array<i32>} : memref<8x256xf32, #tpu.memory_space<vmem>>, vector<8x256xf32>,
    %13 = arith.index_cast %arg0 : i32 to index
    %c0_11 = arith.constant 0 : index
    %c0_12 = arith.constant 0 : index
    %14 = vector.load %arg11[%13, %c0_11, %c0_12] : memref<4x8x512xf32, #tpu.memory_space<vmem>>, vector<1x8x512xf32>
    %15 = vector.shape_cast %14 : vector<1x8x512xf32> to vector<8x512xf32>
    %16 = vector.shape_cast %6 : vector<8x512xf32> to vector<1x8x512xf32>
    tpu.vector_store %arg11[%13, %c0_11, %c0_12], %16 {strides = array<i32>} : memref<4x8x512xf32, #tpu.memory_space<vmem>>, vector<1x8x512xf32>,
    %c3_i32 = arith.constant 3 : i32
    %17 = arith.cmpi eq, %arg0, %c3_i32 : i32
    %18 = arith.extui %17 : i1 to i32
    %c0_i32_13 = arith.constant 0 : i32
    %19 = arith.cmpi ne, %18, %c0_i32_13 : i32
    scf.if %19 {
      %c0_14 = arith.constant 0 : index
      %c0_15 = arith.constant 0 : index
      %20 = vector.load %arg10[%c0_14, %c0_15] : memref<8x256xf32, #tpu.memory_space<vmem>>, vector<8x1xf32>
      %cst_16 = arith.constant 1.000000e+00 : f32
      %21 = vector.broadcast %cst_16 : f32 to vector<8x1xf32>
      %22 = arith.divf %21, %20 : vector<8x1xf32>
      %c0_17 = arith.constant 0 : index
      %c0_18 = arith.constant 0 : index
      %c0_19 = arith.constant 0 : index
      %23 = vector.load %arg11[%c0_17, %c0_18, %c0_19] : memref<4x8x512xf32, #tpu.memory_space<vmem>>, vector<4x8x512xf32>
      %24 = vector.shape_cast %22 : vector<8x1xf32> to vector<1x8x1xf32>
      %25 = vector.broadcast %24 : vector<1x8x1xf32> to vector<4x8x512xf32>
      %26 = arith.mulf %23, %25 : vector<4x8x512xf32>
      %c0_20 = arith.constant 0 : index
      %c0_21 = arith.constant 0 : index
      %c0_22 = arith.constant 0 : index
      %27 = vector.load %arg11[%c0_20, %c0_21, %c0_22] : memref<4x8x512xf32, #tpu.memory_space<vmem>>, vector<4x8x512xf32>
      tpu.vector_store %arg11[%c0_20, %c0_21, %c0_22], %26 {strides = array<i32>} : memref<4x8x512xf32, #tpu.memory_space<vmem>>, vector<4x8x512xf32>,
      %c0_23 = arith.constant 0 : index
      %c0_24 = arith.constant 0 : index
      %28 = vector.load %arg10[%c0_23, %c0_24] : memref<8x256xf32, #tpu.memory_space<vmem>>, vector<8x256xf32>
      %29 = vector.broadcast %22 : vector<8x1xf32> to vector<8x256xf32>
      %30 = arith.mulf %28, %29 : vector<8x256xf32>
      %c0_25 = arith.constant 0 : index
      %c0_26 = arith.constant 0 : index
      %31 = vector.load %arg10[%c0_25, %c0_26] : memref<8x256xf32, #tpu.memory_space<vmem>>, vector<8x256xf32>
      tpu.vector_store %arg10[%c0_25, %c0_26], %30 {strides = array<i32>} : memref<8x256xf32, #tpu.memory_space<vmem>>, vector<8x256xf32>,
    } else {
    }
    return
  }
  func.func @transform_0(%arg0: i32) -> (i32, i32) {
    %c0_i32 = arith.constant 0 : i32
    %c0_i32_0 = arith.constant 0 : i32
    %c0_i32_1 = arith.constant 0 : i32
    return %c0_i32, %c0_i32_0 : i32, i32
  }
  func.func @transform_1(%arg0: i32) -> (i32, i32) {
    %c0_i32 = arith.constant 0 : i32
    %c0_i32_0 = arith.constant 0 : i32
    %c0_i32_1 = arith.constant 0 : i32
    return %c0_i32, %c0_i32_0 : i32, i32
  }
  func.func @transform_2(%arg0: i32) -> (i32, i32) {
    %c0_i32 = arith.constant 0 : i32
    %c0_i32_0 = arith.constant 0 : i32
    %c0_i32_1 = arith.constant 0 : i32
    return %c0_i32, %c0_i32_0 : i32, i32
  }
  func.func @transform_3(%arg0: i32) -> (i32, i32) {
    %c0_i32 = arith.constant 0 : i32
    %c0_i32_0 = arith.constant 0 : i32
    %c0_i32_1 = arith.constant 0 : i32
    return %c0_i32, %c0_i32_0 : i32, i32
  }
  func.func @transform_4(%arg0: i32) -> (i32, i32) {
    %c0_i32 = arith.constant 0 : i32
    %c0_i32_0 = arith.constant 0 : i32
    %c0_i32_1 = arith.constant 0 : i32
    return %c0_i32, %c0_i32_0 : i32, i32
  }
  func.func @transform_5(%arg0: i32) -> (i32, i32) {
    %c0_i32 = arith.constant 0 : i32
    %c0_i32_0 = arith.constant 0 : i32
    %c0_i32_1 = arith.constant 0 : i32
    return %c0_i32, %c0_i32_0 : i32, i32
  }
  func.func @transform_6(%arg0: i32) -> (i32, i32) {
    %c0_i32 = arith.constant 0 : i32
    %c0_i32_0 = arith.constant 0 : i32
    %c0_i32_1 = arith.constant 0 : i32
    return %c0_i32, %c0_i32_0 : i32, i32
  }
  func.func @transform_7(%arg0: i32) -> (i32, i32) {
    %c0_i32 = arith.constant 0 : i32
    %c0_i32_0 = arith.constant 0 : i32
    return %c0_i32, %arg0 : i32, i32
  }
  func.func @transform_8(%arg0: i32) -> (i32, i32) {
    %c0_i32 = arith.constant 0 : i32
    %c0_i32_0 = arith.constant 0 : i32
    return %arg0, %c0_i32 : i32, i32
  }
  func.func @transform_9(%arg0: i32) -> (i32, i32) {
    %c0_i32 = arith.constant 0 : i32
    %c0_i32_0 = arith.constant 0 : i32
    %c0_i32_1 = arith.constant 0 : i32
    return %c0_i32, %c0_i32_0 : i32, i32
  }
  func.func @transform_10(%arg0: i32) -> (i32, i32, i32) {
    %c0_i32 = arith.constant 0 : i32
    %c0_i32_0 = arith.constant 0 : i32
    %c0_i32_1 = arith.constant 0 : i32
    %c0_i32_2 = arith.constant 0 : i32
    return %c0_i32, %c0_i32_0, %c0_i32_1 : i32, i32, i32
  }
}

</mosaic_0001>

<llo_original>
// kernel: network_forward.1
$region0: #{network_forward.1}
  #allocation0 [shape = 'u32[]', space=smem, size = 0x4, offset = 0x4, fixed_abs, tag = 'smem constant byte address 0x4 - core index']
  #allocation1 [shape = 'u32[144,128]{1,0:T(1,128)}', space=vmem, size = 0x12000, scoped, tag = 'internal scratch']
  #allocation2 [shape = 'bf16[8,256]{1,0:T(8,128)(2,1)}', space=vmem, size = 0x1000, scoped, tag = 'scratch operand']
  %s0 = inlined_call_operand.vmem [shape: f32[8,256], index: 0, kind: input, shape index: {}]
  %s1 = inlined_call_operand.hbm [shape: bf16[256,256], index: 1, kind: input, shape index: {}]
  %s2 = inlined_call_operand.vmem [shape: f32[1,256], index: 2, kind: input, shape index: {}]
  %s3 = inlined_call_operand.hbm [shape: bf16[256,256], index: 3, kind: input, shape index: {}]
  %s4 = inlined_call_operand.vmem [shape: f32[1,256], index: 4, kind: input, shape index: {}]
  %s5 = inlined_call_operand.hbm [shape: bf16[256,256], index: 5, kind: input, shape index: {}]
  %s6 = inlined_call_operand.vmem [shape: f32[1,256], index: 6, kind: input, shape index: {}]
  %s7 = inlined_call_operand.hbm [shape: bf16[256,2048], index: 7, kind: input, shape index: {}]
  %s8 = inlined_call_operand.hbm [shape: bf16[2048,256], index: 8, kind: input, shape index: {}]
  %s9 = inlined_call_operand.vmem [shape: f32[8,256], index: 9, kind: output, shape index: {0}]
  %s10 = inlined_call_operand.vmem [shape: f32[4,8,512], index: 10, kind: output, shape index: {1}]
  %11 = xla_tuple %s9, %s10
  %s12 = sld [smem:[#allocation0]]
  $region105: #{network_forward.1} parent=0
    _
  %s14 = ssub.s32 1, %s12
  %s15 = scalar_select 0, %s14, %s12
  $region1: #{network_forward.1} parent=0
    #allocation3 [shape = 'u8[131072]{0}', space=vmem, size = 0x20000, scoped, tag = 'input window, operand 1, single buffered']
    #allocation4 [shape = 's32[2]{0}', space=sflag, size = 0x8, scoped, tag = 'scoped memory for network_forward.1']
    #allocation5 [shape = 'u8[131072]{0}', space=vmem, size = 0x20000, scoped, tag = 'input window, operand 3, single buffered']
    #allocation6 [shape = 's32[1]{0}', space=sflag, size = 0x4, scoped, tag = 'scoped memory for network_forward.1']
    #allocation7 [shape = 'u8[131072]{0}', space=vmem, size = 0x20000, scoped, tag = 'input window, operand 5, single buffered']
    #allocation8 [shape = 'u8[524288]{0}', space=vmem, size = 0x80000, scoped, tag = 'input window, operand 7']
    #allocation9 [shape = 's32[2]{0}', space=sflag, size = 0x8, scoped, tag = 'scoped memory for network_forward.1']
    #allocation10 [shape = 'u8[524288]{0}', space=vmem, size = 0x80000, scoped, tag = 'input window, operand 8']
    %16 = vsyncpa [#allocation4], 0
    %17 = vsyncpa [#allocation6], 0
    %18 = vsyncpa [#allocation9], 0
    %s19 = scalar_lea.sflag [#allocation9], 1
    %20 = vsyncpa %s19, 0
    loop: start=0, step=1, limit=6
    $region2: #{network_forward.1} parent=1 // loop_pre_header
      _
    $region3: #{network_forward.1} parent=1 // loop_header
      %s22 = sphi 0, %s26
      %p23 = scmp.ge.s32.totalorder %s22, 6
      %s30 = sphi 0, %s30
      %s32 = sphi 0, %s30
      %s33 = sphi 0, %s32
      %s47 = sphi 0, %s33
      %s51 = sphi 0, %s51
      %s53 = sphi 0, %s51
      %s54 = sphi 0, %s53
      %s68 = sphi 0, %s54
      %s72 = sphi 0, %s72
      %s74 = sphi 0, %s72
      %s75 = sphi 0, %s74
      %s89 = sphi 0, %s75
      %s93 = sphi 0, %s93
      %s95 = sphi 0, %s93
      %s96 = sphi 0, %s95
      %s110 = sphi 0, %s96
      %s114 = sphi 0, %s114
      %s116 = sphi 0, %s114
      %s117 = sphi 0, %s116
      %s131 = sphi 0, %s117
      %s135 = sphi 0, %s135
      %s137 = sphi 0, %s135
      %s138 = sphi 0, %s137
      %s152 = sphi 0, %s138
      %s156 = sphi 0, %s156
      %s158 = sphi 0, %s156
      %s159 = sphi 0, %s158
      %s173 = sphi 0, %s159
      %s179 = sphi 0, %s181
      %s182 = sphi 0, %s179
      %s183 = sphi 0, %s182
      %s199 = sphi 0, %s183
      %s205 = sphi 0, %s207
      %s208 = sphi 0, %s205
      %s209 = sphi 0, %s208
      %s225 = sphi 0, %s209
      %s229 = sphi 0, %s229
      %s231 = sphi 0, %s229
      %s232 = sphi 0, %s231
      %s246 = sphi 0, %s232
      %s250 = sphi 0, %s250
      %s252 = sphi 0, %s250
      %s253 = sphi 0, %s252
      %s267 = sphi 0, %s253
    $region4: #{network_forward.1} parent=1 // loop_header_branch
      %25 = sbr.rel (%p23) target = $region8
    $region5: #{network_forward.1} parent=1 // loop_body
      %s27 = ssub.s32 %s22, 1
      %s28 = ssub.s32 %s22, 2
      %s29 = sadd.s32 %s22, 1
      %s31 = sadd.s32 %s30, 1
      %p34 = scmp.eq.s32.totalorder %s22, 3
      %p35 = scmp.ne.s32.totalorder %s30, %s32
      %p36 = scmp.eq.s32.totalorder %s22, 0
      %p37 = por %p35, %p36
      %p38 = scmp.ne.s32.totalorder %s30, %s32
      %p39 = scmp.eq.s32.totalorder %s27, 3
      %p40 = por %p38, %p39
      %p41 = scmp.ne.s32.totalorder %s32, %s33
      %p42 = scmp.eq.s32.totalorder %s27, 0
      %p43 = por %p41, %p42
      %p44 = scmp.ne.s32.totalorder %s32, %s33
      %p45 = scmp.eq.s32.totalorder %s28, 3
      %p46 = por %p44, %p45
      %p48 = scmp.ne.s32.totalorder %s33, %s47
      %p49 = scmp.eq.s32.totalorder %s28, 0
      %p50 = por %p48, %p49
      %s52 = sadd.s32 %s51, 1
      %p55 = scmp.eq.s32.totalorder %s22, 3
      %p56 = scmp.ne.s32.totalorder %s51, %s53
      %p57 = scmp.eq.s32.totalorder %s22, 0
      %p58 = por %p56, %p57
      %p59 = scmp.ne.s32.totalorder %s51, %s53
      %p60 = scmp.eq.s32.totalorder %s27, 3
      %p61 = por %p59, %p60
      %p62 = scmp.ne.s32.totalorder %s53, %s54
      %p63 = scmp.eq.s32.totalorder %s27, 0
      %p64 = por %p62, %p63
      %p65 = scmp.ne.s32.totalorder %s53, %s54
      %p66 = scmp.eq.s32.totalorder %s28, 3
      %p67 = por %p65, %p66
      %p69 = scmp.ne.s32.totalorder %s54, %s68
      %p70 = scmp.eq.s32.totalorder %s28, 0
      %p71 = por %p69, %p70
      %s73 = sadd.s32 %s72, 1
      %p76 = scmp.eq.s32.totalorder %s22, 3
      %p77 = scmp.ne.s32.totalorder %s72, %s74
      %p78 = scmp.eq.s32.totalorder %s22, 0
      %p79 = por %p77, %p78
      %p80 = scmp.ne.s32.totalorder %s72, %s74
      %p81 = scmp.eq.s32.totalorder %s27, 3
      %p82 = por %p80, %p81
      %p83 = scmp.ne.s32.totalorder %s74, %s75
      %p84 = scmp.eq.s32.totalorder %s27, 0
      %p85 = por %p83, %p84
      %p86 = scmp.ne.s32.totalorder %s74, %s75
      %p87 = scmp.eq.s32.totalorder %s28, 3
      %p88 = por %p86, %p87
      %p90 = scmp.ne.s32.totalorder %s75, %s89
      %p91 = scmp.eq.s32.totalorder %s28, 0
      %p92 = por %p90, %p91
      %s94 = sadd.s32 %s93, 1
      %p97 = scmp.eq.s32.totalorder %s22, 3
      %p98 = scmp.ne.s32.totalorder %s93, %s95
      %p99 = scmp.eq.s32.totalorder %s22, 0
      %p100 = por %p98, %p99
      %p101 = scmp.ne.s32.totalorder %s93, %s95
      %p102 = scmp.eq.s32.totalorder %s27, 3
      %p103 = por %p101, %p102
      %p104 = scmp.ne.s32.totalorder %s95, %s96
      %p105 = scmp.eq.s32.totalorder %s27, 0
      %p106 = por %p104, %p105
      %p107 = scmp.ne.s32.totalorder %s95, %s96
      %p108 = scmp.eq.s32.totalorder %s28, 3
      %p109 = por %p107, %p108
      %p111 = scmp.ne.s32.totalorder %s96, %s110
      %p112 = scmp.eq.s32.totalorder %s28, 0
      %p113 = por %p111, %p112
      %s115 = sadd.s32 %s114, 1
      %p118 = scmp.eq.s32.totalorder %s22, 3
      %p119 = scmp.ne.s32.totalorder %s114, %s116
      %p120 = scmp.eq.s32.totalorder %s22, 0
      %p121 = por %p119, %p120
      %p122 = scmp.ne.s32.totalorder %s114, %s116
      %p123 = scmp.eq.s32.totalorder %s27, 3
      %p124 = por %p122, %p123
      %p125 = scmp.ne.s32.totalorder %s116, %s117
      %p126 = scmp.eq.s32.totalorder %s27, 0
      %p127 = por %p125, %p126
      %p128 = scmp.ne.s32.totalorder %s116, %s117
      %p129 = scmp.eq.s32.totalorder %s28, 3
      %p130 = por %p128, %p129
      %p132 = scmp.ne.s32.totalorder %s117, %s131
      %p133 = scmp.eq.s32.totalorder %s28, 0
      %p134 = por %p132, %p133
      %s136 = sadd.s32 %s135, 1
      %p139 = scmp.eq.s32.totalorder %s22, 3
      %p140 = scmp.ne.s32.totalorder %s135, %s137
      %p141 = scmp.eq.s32.totalorder %s22, 0
      %p142 = por %p140, %p141
      %p143 = scmp.ne.s32.totalorder %s135, %s137
      %p144 = scmp.eq.s32.totalorder %s27, 3
      %p145 = por %p143, %p144
      %p146 = scmp.ne.s32.totalorder %s137, %s138
      %p147 = scmp.eq.s32.totalorder %s27, 0
      %p148 = por %p146, %p147
      %p149 = scmp.ne.s32.totalorder %s137, %s138
      %p150 = scmp.eq.s32.totalorder %s28, 3
      %p151 = por %p149, %p150
      %p153 = scmp.ne.s32.totalorder %s138, %s152
      %p154 = scmp.eq.s32.totalorder %s28, 0
      %p155 = por %p153, %p154
      %s157 = sadd.s32 %s156, 1
      %p160 = scmp.eq.s32.totalorder %s22, 3
      %p161 = scmp.ne.s32.totalorder %s156, %s158
      %p162 = scmp.eq.s32.totalorder %s22, 0
      %p163 = por %p161, %p162
      %p164 = scmp.ne.s32.totalorder %s156, %s158
      %p165 = scmp.eq.s32.totalorder %s27, 3
      %p166 = por %p164, %p165
      %p167 = scmp.ne.s32.totalorder %s158, %s159
      %p168 = scmp.eq.s32.totalorder %s27, 0
      %p169 = por %p167, %p168
      %p170 = scmp.ne.s32.totalorder %s158, %s159
      %p171 = scmp.eq.s32.totalorder %s28, 3
      %p172 = por %p170, %p171
      %p174 = scmp.ne.s32.totalorder %s159, %s173
      %p175 = scmp.eq.s32.totalorder %s28, 0
      %p176 = por %p174, %p175
      %s177 = ssub.s32 %s22, %s29
      %p178 = scmp.eq.s32.totalorder %s177, 0
      %s180 = sadd.s32 %s179, 1
      %s181 = scalar_select %p178, %s179, %s180
      %p184 = pneg %p178
      %p185 = scmp.eq.s32.totalorder %s22, 3
      %p186 = por %p184, %p185
      %p187 = scmp.ne.s32.totalorder %s179, %s182
      %p188 = scmp.eq.s32.totalorder %s22, 0
      %p189 = por %p187, %p188
      %p190 = scmp.ne.s32.totalorder %s179, %s182
      %p191 = scmp.eq.s32.totalorder %s27, 3
      %p192 = por %p190, %p191
      %p193 = scmp.ne.s32.totalorder %s182, %s183
      %p194 = scmp.eq.s32.totalorder %s27, 0
      %p195 = por %p193, %p194
      %p196 = scmp.ne.s32.totalorder %s182, %s183
      %p197 = scmp.eq.s32.totalorder %s28, 3
      %p198 = por %p196, %p197
      %p200 = scmp.ne.s32.totalorder %s183, %s199
      %p201 = scmp.eq.s32.totalorder %s28, 0
      %p202 = por %p200, %p201
      %s203 = ssub.s32 %s22, %s29
      %p204 = scmp.eq.s32.totalorder %s203, 0
      %s206 = sadd.s32 %s205, 1
      %s207 = scalar_select %p204, %s205, %s206
      %p210 = pneg %p204
      %p211 = scmp.eq.s32.totalorder %s22, 3
      %p212 = por %p210, %p211
      %p213 = scmp.ne.s32.totalorder %s205, %s208
      %p214 = scmp.eq.s32.totalorder %s22, 0
      %p215 = por %p213, %p214
      %p216 = scmp.ne.s32.totalorder %s205, %s208
      %p217 = scmp.eq.s32.totalorder %s27, 3
      %p218 = por %p216, %p217
      %p219 = scmp.ne.s32.totalorder %s208, %s209
      %p220 = scmp.eq.s32.totalorder %s27, 0
      %p221 = por %p219, %p220
      %p222 = scmp.ne.s32.totalorder %s208, %s209
      %p223 = scmp.eq.s32.totalorder %s28, 3
      %p224 = por %p222, %p223
      %p226 = scmp.ne.s32.totalorder %s209, %s225
      %p227 = scmp.eq.s32.totalorder %s28, 0
      %p228 = por %p226, %p227
      %s230 = sadd.s32 %s229, 1
      %p233 = scmp.eq.s32.totalorder %s22, 3
      %p234 = scmp.ne.s32.totalorder %s229, %s231
      %p235 = scmp.eq.s32.totalorder %s22, 0
      %p236 = por %p234, %p235
      %p237 = scmp.ne.s32.totalorder %s229, %s231
      %p238 = scmp.eq.s32.totalorder %s27, 3
      %p239 = por %p237, %p238
      %p240 = scmp.ne.s32.totalorder %s231, %s232
      %p241 = scmp.eq.s32.totalorder %s27, 0
      %p242 = por %p240, %p241
      %p243 = scmp.ne.s32.totalorder %s231, %s232
      %p244 = scmp.eq.s32.totalorder %s28, 3
      %p245 = por %p243, %p244
      %p247 = scmp.ne.s32.totalorder %s232, %s246
      %p248 = scmp.eq.s32.totalorder %s28, 0
      %p249 = por %p247, %p248
      %s251 = sadd.s32 %s250, 1
      %p254 = scmp.eq.s32.totalorder %s22, 3
      %p255 = scmp.ne.s32.totalorder %s250, %s252
      %p256 = scmp.eq.s32.totalorder %s22, 0
      %p257 = por %p255, %p256
      %p258 = scmp.ne.s32.totalorder %s250, %s252
      %p259 = scmp.eq.s32.totalorder %s27, 3
      %p260 = por %p258, %p259
      %p261 = scmp.ne.s32.totalorder %s252, %s253
      %p262 = scmp.eq.s32.totalorder %s27, 0
      %p263 = por %p261, %p262
      %p264 = scmp.ne.s32.totalorder %s252, %s253
      %p265 = scmp.eq.s32.totalorder %s28, 3
      %p266 = por %p264, %p265
      %p268 = scmp.ne.s32.totalorder %s253, %s267
      %p269 = scmp.eq.s32.totalorder %s28, 0
      %p270 = por %p268, %p269
      %p271 = scmp.le.s32.totalorder 1, %s22
      %p272 = scmp.lt.s32.totalorder %s22, 5
      %p273 = pnand %p271, %p272
      %p274 = pneg %p273
      // Predicated region
      $region9: #{network_forward.1} parent=5 // pred_check
        _
      $region10: #{network_forward.1} parent=5 // pred_check_branch
        %276 = sbr.rel (%p273) target = $region12
      $region11: #{network_forward.1} parent=5 // pred_region
        %s277 = ssub.s32 %s22, 1
        // Predicated region
        $region13: #{network_forward.1} parent=11 // pred_check
          %p278 = pneg %p43
        $region14: #{network_forward.1} parent=11 // pred_check_branch
          %280 = sbr.rel (%p278) target = $region16
        $region15: #{network_forward.1} parent=11 // pred_region
          _
        $region16: #{network_forward.1} parent=11 // pred_fallthru
          _
        // Predicated region
        $region17: #{network_forward.1} parent=11 // pred_check
          %p281 = pneg %p64
        $region18: #{network_forward.1} parent=11 // pred_check_branch
          %283 = sbr.rel (%p281) target = $region20
        $region19: #{network_forward.1} parent=11 // pred_region
          %s285 = ssub.s32 4096, 4096
          %286 = vsyncadd [#allocation4], %s285
          %s287 = sshll.u32 [#allocation3], 4
          %s288 = int_to_ptr.vmem [resolvable:$true] %s287
          %293 = dma.hbm_to_vmem [thread:$0]  %s1, 4096, %s288, [#allocation4], 128, 128, 8
        $region20: #{network_forward.1} parent=11 // pred_fallthru
          _
        // Predicated region
        $region21: #{network_forward.1} parent=11 // pred_check
          %p294 = pneg %p85
        $region22: #{network_forward.1} parent=11 // pred_check_branch
          %296 = sbr.rel (%p294) target = $region24
        $region23: #{network_forward.1} parent=11 // pred_region
          _
        $region24: #{network_forward.1} parent=11 // pred_fallthru
          _
        // Predicated region
        $region25: #{network_forward.1} parent=11 // pred_check
          %p297 = pneg %p106
        $region26: #{network_forward.1} parent=11 // pred_check_branch
          %299 = sbr.rel (%p297) target = $region28
        $region27: #{network_forward.1} parent=11 // pred_region
          %s301 = ssub.s32 4096, 4096
          %302 = vsyncadd [#allocation6], %s301
          %s303 = sshll.u32 [#allocation5], 4
          %s304 = int_to_ptr.vmem [resolvable:$true] %s303
          %309 = dma.hbm_to_vmem [thread:$0]  %s3, 4096, %s304, [#allocation6], 128, 128, 8
        $region28: #{network_forward.1} parent=11 // pred_fallthru
          _
        // Predicated region
        $region29: #{network_forward.1} parent=11 // pred_check
          %p310 = pneg %p127
        $region30: #{network_forward.1} parent=11 // pred_check_branch
          %312 = sbr.rel (%p310) target = $region32
        $region31: #{network_forward.1} parent=11 // pred_region
          _
        $region32: #{network_forward.1} parent=11 // pred_fallthru
          _
        // Predicated region
        $region33: #{network_forward.1} parent=11 // pred_check
          %p313 = pneg %p148
        $region34: #{network_forward.1} parent=11 // pred_check_branch
          %315 = sbr.rel (%p313) target = $region36
        $region35: #{network_forward.1} parent=11 // pred_region
          %s317 = ssub.s32 4096, 4096
          %318 = vsyncadd [#allocation6], %s317
          %s319 = sshll.u32 [#allocation7], 4
          %s320 = int_to_ptr.vmem [resolvable:$true] %s319
          %325 = dma.hbm_to_vmem [thread:$0]  %s5, 4096, %s320, [#allocation6], 128, 128, 8
        $region36: #{network_forward.1} parent=11 // pred_fallthru
          _
        // Predicated region
        $region37: #{network_forward.1} parent=11 // pred_check
          %p326 = pneg %p169
        $region38: #{network_forward.1} parent=11 // pred_check_branch
          %328 = sbr.rel (%p326) target = $region40
        $region39: #{network_forward.1} parent=11 // pred_region
          _
        $region40: #{network_forward.1} parent=11 // pred_fallthru
          _
      $region12: #{network_forward.1} parent=5 // pred_fallthru
        _
      %p329 = scmp.lt.s32.totalorder %s22, 4
      // Predicated region
      $region41: #{network_forward.1} parent=5 // pred_check
        %p330 = pneg %p329
      $region42: #{network_forward.1} parent=5 // pred_check_branch
        %332 = sbr.rel (%p330) target = $region44
      $region43: #{network_forward.1} parent=5 // pred_region
        // Predicated region
        $region45: #{network_forward.1} parent=43 // pred_check
          %p333 = pneg %p189
        $region46: #{network_forward.1} parent=43 // pred_check_branch
          %335 = sbr.rel (%p333) target = $region48
        $region47: #{network_forward.1} parent=43 // pred_region
          %s336 = sand.u32 %s22, 1
          %s337 = scalar_lea.sflag [#allocation9], %s336
          %s338 = sand.u32 %s179, 1
          %s339 = smul.addr %s338, 512
          %s340 = scalar_lea.vmem [#allocation8], %s339
          %s341 = smul.u32 4, %s22
          %s343 = ssub.s32 8192, 8192
          %344 = vsyncadd %s337, %s343
          %s345 = smul.addr %s341, 64
          %s346 = scalar_lea.hbm %s7, %s345
          %s347 = sshll.u32 %s340, 4
          %s348 = int_to_ptr.vmem [resolvable:$true] %s347
          %353 = dma.hbm_to_vmem [thread:$0]  %s346, 8192, %s348, %s337, 1024, 256, 16
        $region48: #{network_forward.1} parent=43 // pred_fallthru
          _
        // Predicated region
        $region49: #{network_forward.1} parent=43 // pred_check
          %p354 = pneg %p215
        $region50: #{network_forward.1} parent=43 // pred_check_branch
          %356 = sbr.rel (%p354) target = $region52
        $region51: #{network_forward.1} parent=43 // pred_region
          %s357 = sand.u32 %s22, 1
          %s358 = scalar_lea.sflag [#allocation9], %s357
          %s359 = sand.u32 %s205, 1
          %s360 = smul.addr %s359, 512
          %s361 = scalar_lea.vmem [#allocation10], %s360
          %s362 = smul.u32 64, %s22
          %s364 = ssub.s32 8192, 8192
          %365 = vsyncadd %s358, %s364
          %s366 = smul.addr %s362, 2
          %s367 = smul.addr %s366, 64
          %s368 = scalar_lea.hbm %s8, %s367
          %s369 = sshll.u32 %s361, 4
          %s370 = int_to_ptr.vmem [resolvable:$true] %s369
          %375 = dma.hbm_to_vmem [thread:$0]  %s368, 8192, %s370, %s358, 128, 128, 8
        $region52: #{network_forward.1} parent=43 // pred_fallthru
          _
      $region44: #{network_forward.1} parent=5 // pred_fallthru
        _
      %p376 = scmp.le.s32.totalorder 1, %s22
      %p377 = scmp.lt.s32.totalorder %s22, 5
      %p378 = pnand %p376, %p377
      %p379 = pneg %p378
      // Predicated region
      $region53: #{network_forward.1} parent=5 // pred_check
        _
      $region54: #{network_forward.1} parent=5 // pred_check_branch
        %381 = sbr.rel (%p378) target = $region56
      $region55: #{network_forward.1} parent=5 // pred_region
        %s382 = ssub.s32 %s22, 1
        // Predicated region
        $region57: #{network_forward.1} parent=55 // pred_check
          %p383 = pneg %p64
        $region58: #{network_forward.1} parent=55 // pred_check_branch
          %385 = sbr.rel (%p383) target = $region60
        $region59: #{network_forward.1} parent=55 // pred_region
          %386 = dma.done [#allocation4], 4096
        $region60: #{network_forward.1} parent=55 // pred_fallthru
          _
        // Predicated region
        $region61: #{network_forward.1} parent=55 // pred_check
          %p387 = pneg %p106
        $region62: #{network_forward.1} parent=55 // pred_check_branch
          %389 = sbr.rel (%p387) target = $region64
        $region63: #{network_forward.1} parent=55 // pred_region
          %390 = dma.done [#allocation6], 4096
        $region64: #{network_forward.1} parent=55 // pred_fallthru
          _
        // Predicated region
        $region65: #{network_forward.1} parent=55 // pred_check
          %p391 = pneg %p148
        $region66: #{network_forward.1} parent=55 // pred_check_branch
          %393 = sbr.rel (%p391) target = $region68
        $region67: #{network_forward.1} parent=55 // pred_region
          %394 = dma.done [#allocation6], 4096
        $region68: #{network_forward.1} parent=55 // pred_fallthru
          _
        %s395 = sand.u32 %s27, 1
        %s396 = scalar_lea.sflag [#allocation9], %s395
        %s397 = sand.u32 %s182, 1
        %s398 = smul.addr %s397, 512
        %s399 = scalar_lea.vmem [#allocation8], %s398
        // Predicated region
        $region69: #{network_forward.1} parent=55 // pred_check
          %p400 = pneg %p195
        $region70: #{network_forward.1} parent=55 // pred_check_branch
          %402 = sbr.rel (%p400) target = $region72
        $region71: #{network_forward.1} parent=55 // pred_region
          %403 = dma.done %s396, 8192
        $region72: #{network_forward.1} parent=55 // pred_fallthru
          _
        %s404 = sand.u32 %s27, 1
        %s405 = scalar_lea.sflag [#allocation9], %s404
        %s406 = sand.u32 %s208, 1
        %s407 = smul.addr %s406, 512
        %s408 = scalar_lea.vmem [#allocation10], %s407
        // Predicated region
        $region73: #{network_forward.1} parent=55 // pred_check
          %p409 = pneg %p221
        $region74: #{network_forward.1} parent=55 // pred_check_branch
          %411 = sbr.rel (%p409) target = $region76
        $region75: #{network_forward.1} parent=55 // pred_region
          %412 = dma.done %s405, 8192
        $region76: #{network_forward.1} parent=55 // pred_fallthru
          _
        %p413 = pneg %p43
        %p414 = pneg %p40
        %p415 = pneg %p64
        %p416 = pneg %p61
        %p417 = pneg %p85
        %p418 = pneg %p82
        %p419 = pneg %p106
        %p420 = pneg %p103
        %p421 = pneg %p127
        %p422 = pneg %p124
        %p423 = pneg %p148
        %p424 = pneg %p145
        %p425 = pneg %p169
        %p426 = pneg %p166
        %s427 = sand.u32 %s27, 1
        %s428 = scalar_lea.sflag [#allocation9], %s427
        %s429 = sand.u32 %s182, 1
        %s430 = smul.addr %s429, 512
        %s431 = scalar_lea.vmem [#allocation8], %s430
        %p432 = pneg %p195
        %p433 = pneg %p192
        %s434 = sand.u32 %s27, 1
        %s435 = scalar_lea.sflag [#allocation9], %s434
        %s436 = sand.u32 %s208, 1
        %s437 = smul.addr %s436, 512
        %s438 = scalar_lea.vmem [#allocation10], %s437
        %p439 = pneg %p221
        %p440 = pneg %p218
        %p441 = pneg %p242
        %p442 = pneg %p239
        %p443 = pneg %p263
        %p444 = pneg %p260
        %s445 = smul.u32 4, %s27
        %s446 = smul.u32 64, %s27
        %p447 = scmp.eq.s32.totalorder %s27, 0
        // Predicated region
        $region77: #{network_forward.1} parent=55 // pred_check
          %p448 = pneg %p447
        $region78: #{network_forward.1} parent=55 // pred_check_branch
          %450 = sbr.rel (%p448) target = $region80
        $region79: #{network_forward.1} parent=55 // pred_region
          %v451 = vld [vmem:[%s0] sm:$0xff]
          %v452 = vld [vmem:[%s0 + $0x8] sm:$0xff]
          %v453 = vpack.c.bf16 %v451, %v451
          %v454 = vpack.c.bf16 %v452, %v452
          %v455 = vld [vmem:[#allocation3] sm:$0xff]
          %v456 = vld [vmem:[#allocation3 + $0x8] sm:$0xff]
          %v457 = vld [vmem:[#allocation3 + $0x10] sm:$0xff]
          %v458 = vld [vmem:[#allocation3 + $0x18] sm:$0xff]
          %v459 = vld [vmem:[#allocation3 + $0x20] sm:$0xff]
          %v460 = vld [vmem:[#allocation3 + $0x28] sm:$0xff]
          %v461 = vld [vmem:[#allocation3 + $0x30] sm:$0xff]
          %v462 = vld [vmem:[#allocation3 + $0x38] sm:$0xff]
          %v463 = vld [vmem:[#allocation3 + $0x40] sm:$0xff]
          %v464 = vld [vmem:[#allocation3 + $0x48] sm:$0xff]
          %v465 = vld [vmem:[#allocation3 + $0x50] sm:$0xff]
          %v466 = vld [vmem:[#allocation3 + $0x58] sm:$0xff]
          %v467 = vld [vmem:[#allocation3 + $0x60] sm:$0xff]
          %v468 = vld [vmem:[#allocation3 + $0x68] sm:$0xff]
          %v469 = vld [vmem:[#allocation3 + $0x70] sm:$0xff]
          %v470 = vld [vmem:[#allocation3 + $0x78] sm:$0xff]
          %v471 = vld [vmem:[#allocation3 + $0x80] sm:$0xff]
          %v472 = vld [vmem:[#allocation3 + $0x88] sm:$0xff]
          %v473 = vld [vmem:[#allocation3 + $0x90] sm:$0xff]
          %v474 = vld [vmem:[#allocation3 + $0x98] sm:$0xff]
          %v475 = vld [vmem:[#allocation3 + $0xa0] sm:$0xff]
          %v476 = vld [vmem:[#allocation3 + $0xa8] sm:$0xff]
          %v477 = vld [vmem:[#allocation3 + $0xb0] sm:$0xff]
          %v478 = vld [vmem:[#allocation3 + $0xb8] sm:$0xff]
          %v479 = vld [vmem:[#allocation3 + $0xc0] sm:$0xff]
          %v480 = vld [vmem:[#allocation3 + $0xc8] sm:$0xff]
          %v481 = vld [vmem:[#allocation3 + $0xd0] sm:$0xff]
          %v482 = vld [vmem:[#allocation3 + $0xd8] sm:$0xff]
          %v483 = vld [vmem:[#allocation3 + $0xe0] sm:$0xff]
          %v484 = vld [vmem:[#allocation3 + $0xe8] sm:$0xff]
          %v485 = vld [vmem:[#allocation3 + $0xf0] sm:$0xff]
          %v486 = vld [vmem:[#allocation3 + $0xf8] sm:$0xff]
          %v487 = vld [vmem:[%s2] sm:$0x3]
          %v489 = vlaneseq
          %v490 = vshrl.u32 %v489, 7
          %v491 = vsub.s32 0, %v490
          %v492 = vrot.slane %v487, %v491
          %v493 = vlaneseq
          %v494 = vshrl.u32 %v493, 7
          %v495 = vsub.s32 1, %v494
          %v496 = vrot.slane %v487, %v495
          %v531 = vunpack.c.l.b16 %v455
          %v532 = vunpack.c.h.b16 %v455
          %v533 = vunpack.c.l.b16 %v456
          %v534 = vunpack.c.h.b16 %v456
          %v535 = vunpack.c.l.b16 %v457
          %v536 = vunpack.c.h.b16 %v457
          %v537 = vunpack.c.l.b16 %v458
          %v538 = vunpack.c.h.b16 %v458
          %v539 = vunpack.c.l.b16 %v459
          %v540 = vunpack.c.h.b16 %v459
          %v541 = vunpack.c.l.b16 %v460
          %v542 = vunpack.c.h.b16 %v460
          %v543 = vunpack.c.l.b16 %v461
          %v544 = vunpack.c.h.b16 %v461
          %v545 = vunpack.c.l.b16 %v462
          %v546 = vunpack.c.h.b16 %v462
          %v547 = vunpack.c.l.b16 %v463
          %v548 = vunpack.c.h.b16 %v463
          %v549 = vunpack.c.l.b16 %v464
          %v550 = vunpack.c.h.b16 %v464
          %v551 = vunpack.c.l.b16 %v465
          %v552 = vunpack.c.h.b16 %v465
          %v553 = vunpack.c.l.b16 %v466
          %v554 = vunpack.c.h.b16 %v466
          %v555 = vunpack.c.l.b16 %v467
          %v556 = vunpack.c.h.b16 %v467
          %v557 = vunpack.c.l.b16 %v468
          %v558 = vunpack.c.h.b16 %v468
          %v559 = vunpack.c.l.b16 %v469
          %v560 = vunpack.c.h.b16 %v469
          %v561 = vunpack.c.l.b16 %v470
          %v562 = vunpack.c.h.b16 %v470
          %v563 = vunpack.c.l.b16 %v471
          %v564 = vunpack.c.h.b16 %v471
          %v565 = vunpack.c.l.b16 %v472
          %v566 = vunpack.c.h.b16 %v472
          %v567 = vunpack.c.l.b16 %v473
          %v568 = vunpack.c.h.b16 %v473
          %v569 = vunpack.c.l.b16 %v474
          %v570 = vunpack.c.h.b16 %v474
          %v571 = vunpack.c.l.b16 %v475
          %v572 = vunpack.c.h.b16 %v475
          %v573 = vunpack.c.l.b16 %v476
          %v574 = vunpack.c.h.b16 %v476
          %v575 = vunpack.c.l.b16 %v477
          %v576 = vunpack.c.h.b16 %v477
          %v577 = vunpack.c.l.b16 %v478
          %v578 = vunpack.c.h.b16 %v478
          %v579 = vunpack.c.l.b16 %v479
          %v580 = vunpack.c.h.b16 %v479
          %v581 = vunpack.c.l.b16 %v480
          %v582 = vunpack.c.h.b16 %v480
          %v583 = vunpack.c.l.b16 %v481
          %v584 = vunpack.c.h.b16 %v481
          %v585 = vunpack.c.l.b16 %v482
          %v586 = vunpack.c.h.b16 %v482
          %v587 = vunpack.c.l.b16 %v483
          %v588 = vunpack.c.h.b16 %v483
          %v589 = vunpack.c.l.b16 %v484
          %v590 = vunpack.c.h.b16 %v484
          %v591 = vunpack.c.l.b16 %v485
          %v592 = vunpack.c.h.b16 %v485
          %v593 = vunpack.c.l.b16 %v486
          %v594 = vunpack.c.h.b16 %v486
          %v595 = vpack.c.b16 %v533, %v531
          %v596 = vpack.c.b16 %v534, %v532
          %v597 = vpack.c.b16 %v537, %v535
          %v598 = vpack.c.b16 %v538, %v536
          %v599 = vpack.c.b16 %v541, %v539
          %v600 = vpack.c.b16 %v542, %v540
          %v601 = vpack.c.b16 %v545, %v543
          %v602 = vpack.c.b16 %v546, %v544
          %v603 = vpack.c.b16 %v549, %v547
          %v604 = vpack.c.b16 %v550, %v548
          %v605 = vpack.c.b16 %v553, %v551
          %v606 = vpack.c.b16 %v554, %v552
          %v607 = vpack.c.b16 %v557, %v555
          %v608 = vpack.c.b16 %v558, %v556
          %v609 = vpack.c.b16 %v561, %v559
          %v610 = vpack.c.b16 %v562, %v560
          %v611 = vpack.c.b16 %v565, %v563
          %v612 = vpack.c.b16 %v566, %v564
          %v613 = vpack.c.b16 %v569, %v567
          %v614 = vpack.c.b16 %v570, %v568
          %v615 = vpack.c.b16 %v573, %v571
          %v616 = vpack.c.b16 %v574, %v572
          %v617 = vpack.c.b16 %v577, %v575
          %v618 = vpack.c.b16 %v578, %v576
          %v619 = vpack.c.b16 %v581, %v579
          %v620 = vpack.c.b16 %v582, %v580
          %v621 = vpack.c.b16 %v585, %v583
          %v622 = vpack.c.b16 %v586, %v584
          %v623 = vpack.c.b16 %v589, %v587
          %v624 = vpack.c.b16 %v590, %v588
          %v625 = vpack.c.b16 %v593, %v591
          %v626 = vpack.c.b16 %v594, %v592
          %659 = vmatprep.subr.bf16.mxu0 %v596
          %660 = vmatpush1.bf16.msra.mxu0 %v595
          %661 = vmatprep.subr.bf16.mxu0 %v598
          %662 = vmatpush1.bf16.msra.mxu0 %v597
          %663 = vmatprep.subr.bf16.mxu0 %v600
          %664 = vmatpush1.bf16.msra.mxu0 %v599
          %665 = vmatprep.subr.bf16.mxu0 %v602
          %666 = vmatpush1.bf16.msra.mxu0 %v601
          %667 = vmatprep.subr.bf16.mxu0 %v604
          %668 = vmatpush1.bf16.msra.mxu0 %v603
          %669 = vmatprep.subr.bf16.mxu0 %v606
          %670 = vmatpush1.bf16.msra.mxu0 %v605
          %671 = vmatprep.subr.bf16.mxu0 %v608
          %672 = vmatpush1.bf16.msra.mxu0 %v607
          %673 = vmatprep.subr.bf16.mxu0 %v610
          %674 = vmatpush1.bf16.msra.mxu0 %v609
          %675 = vmatprep.subr.bf16.mxu0 %v612
          %676 = vmatpush1.bf16.msra.mxu0 %v611
          %677 = vmatprep.subr.bf16.mxu0 %v614
          %678 = vmatpush1.bf16.msra.mxu0 %v613
          %679 = vmatprep.subr.bf16.mxu0 %v616
          %680 = vmatpush1.bf16.msra.mxu0 %v615
          %681 = vmatprep.subr.bf16.mxu0 %v618
          %682 = vmatpush1.bf16.msra.mxu0 %v617
          %683 = vmatprep.subr.bf16.mxu0 %v620
          %684 = vmatpush1.bf16.msra.mxu0 %v619
          %685 = vmatprep.subr.bf16.mxu0 %v622
          %686 = vmatpush1.bf16.msra.mxu0 %v621
          %687 = vmatprep.subr.bf16.mxu0 %v624
          %688 = vmatpush1.bf16.msra.mxu0 %v623
          %689 = vmatprep.subr.bf16.mxu0 %v626
          %690 = vmatpush1.bf16.msra.mxu0 %v625
          %691 = vmatprep.mubr.bf16.mxu0 %v454
          %692 = vmatmul.mubr.bf16.gmra.mrb[0].mxu0 %v453
          %v693 = vpop.f32.mrb[0].mxu0
          %v694 = vadd.f32 %v492, %v693
          %v695 = vpop.f32.mrb[0].mxu0
          %v696 = vadd.f32 %v496, %v695
          %v697 = vpop.f32.mrb[0].mxu0
          %v698 = vpop.f32.mrb[0].mxu0
          %699 = vdwg.mxu0
          %v700 = vtanh.pop %v694
          %v701 = vtanh.pop %v696
          %v702 = vpack.c.bf16 %v700, %v700
          %v703 = vpack.c.bf16 %v701, %v701
          %v704 = vld [vmem:[#allocation5] sm:$0xff]
          %v705 = vld [vmem:[#allocation5 + $0x8] sm:$0xff]
          %v706 = vld [vmem:[#allocation5 + $0x10] sm:$0xff]
          %v707 = vld [vmem:[#allocation5 + $0x18] sm:$0xff]
          %v708 = vld [vmem:[#allocation5 + $0x20] sm:$0xff]
          %v709 = vld [vmem:[#allocation5 + $0x28] sm:$0xff]
          %v710 = vld [vmem:[#allocation5 + $0x30] sm:$0xff]
          %v711 = vld [vmem:[#allocation5 + $0x38] sm:$0xff]
          %v712 = vld [vmem:[#allocation5 + $0x40] sm:$0xff]
          %v713 = vld [vmem:[#allocation5 + $0x48] sm:$0xff]
          %v714 = vld [vmem:[#allocation5 + $0x50] sm:$0xff]
          %v715 = vld [vmem:[#allocation5 + $0x58] sm:$0xff]
          %v716 = vld [vmem:[#allocation5 + $0x60] sm:$0xff]
          %v717 = vld [vmem:[#allocation5 + $0x68] sm:$0xff]
          %v718 = vld [vmem:[#allocation5 + $0x70] sm:$0xff]
          %v719 = vld [vmem:[#allocation5 + $0x78] sm:$0xff]
          %v720 = vld [vmem:[#allocation5 + $0x80] sm:$0xff]
          %v721 = vld [vmem:[#allocation5 + $0x88] sm:$0xff]
          %v722 = vld [vmem:[#allocation5 + $0x90] sm:$0xff]
          %v723 = vld [vmem:[#allocation5 + $0x98] sm:$0xff]
          %v724 = vld [vmem:[#allocation5 + $0xa0] sm:$0xff]
          %v725 = vld [vmem:[#allocation5 + $0xa8] sm:$0xff]
          %v726 = vld [vmem:[#allocation5 + $0xb0] sm:$0xff]
          %v727 = vld [vmem:[#allocation5 + $0xb8] sm:$0xff]
          %v728 = vld [vmem:[#allocation5 + $0xc0] sm:$0xff]
          %v729 = vld [vmem:[#allocation5 + $0xc8] sm:$0xff]
          %v730 = vld [vmem:[#allocation5 + $0xd0] sm:$0xff]
          %v731 = vld [vmem:[#allocation5 + $0xd8] sm:$0xff]
          %v732 = vld [vmem:[#allocation5 + $0xe0] sm:$0xff]
          %v733 = vld [vmem:[#allocation5 + $0xe8] sm:$0xff]
          %v734 = vld [vmem:[#allocation5 + $0xf0] sm:$0xff]
          %v735 = vld [vmem:[#allocation5 + $0xf8] sm:$0xff]
          %v736 = vld [vmem:[%s4] sm:$0x3]
          %v738 = vlaneseq
          %v739 = vshrl.u32 %v738, 7
          %v740 = vsub.s32 0, %v739
          %v741 = vrot.slane %v736, %v740
          %v742 = vlaneseq
          %v743 = vshrl.u32 %v742, 7
          %v744 = vsub.s32 1, %v743
          %v745 = vrot.slane %v736, %v744
          %v780 = vunpack.c.l.b16 %v704
          %v781 = vunpack.c.h.b16 %v704
          %v782 = vunpack.c.l.b16 %v705
          %v783 = vunpack.c.h.b16 %v705
          %v784 = vunpack.c.l.b16 %v706
          %v785 = vunpack.c.h.b16 %v706
          %v786 = vunpack.c.l.b16 %v707
          %v787 = vunpack.c.h.b16 %v707
          %v788 = vunpack.c.l.b16 %v708
          %v789 = vunpack.c.h.b16 %v708
          %v790 = vunpack.c.l.b16 %v709
          %v791 = vunpack.c.h.b16 %v709
          %v792 = vunpack.c.l.b16 %v710
          %v793 = vunpack.c.h.b16 %v710
          %v794 = vunpack.c.l.b16 %v711
          %v795 = vunpack.c.h.b16 %v711
          %v796 = vunpack.c.l.b16 %v712
          %v797 = vunpack.c.h.b16 %v712
          %v798 = vunpack.c.l.b16 %v713
          %v799 = vunpack.c.h.b16 %v713
          %v800 = vunpack.c.l.b16 %v714
          %v801 = vunpack.c.h.b16 %v714
          %v802 = vunpack.c.l.b16 %v715
          %v803 = vunpack.c.h.b16 %v715
          %v804 = vunpack.c.l.b16 %v716
          %v805 = vunpack.c.h.b16 %v716
          %v806 = vunpack.c.l.b16 %v717
          %v807 = vunpack.c.h.b16 %v717
          %v808 = vunpack.c.l.b16 %v718
          %v809 = vunpack.c.h.b16 %v718
          %v810 = vunpack.c.l.b16 %v719
          %v811 = vunpack.c.h.b16 %v719
          %v812 = vunpack.c.l.b16 %v720
          %v813 = vunpack.c.h.b16 %v720
          %v814 = vunpack.c.l.b16 %v721
          %v815 = vunpack.c.h.b16 %v721
          %v816 = vunpack.c.l.b16 %v722
          %v817 = vunpack.c.h.b16 %v722
          %v818 = vunpack.c.l.b16 %v723
          %v819 = vunpack.c.h.b16 %v723
          %v820 = vunpack.c.l.b16 %v724
          %v821 = vunpack.c.h.b16 %v724
          %v822 = vunpack.c.l.b16 %v725
          %v823 = vunpack.c.h.b16 %v725
          %v824 = vunpack.c.l.b16 %v726
          %v825 = vunpack.c.h.b16 %v726
          %v826 = vunpack.c.l.b16 %v727
          %v827 = vunpack.c.h.b16 %v727
          %v828 = vunpack.c.l.b16 %v728
          %v829 = vunpack.c.h.b16 %v728
          %v830 = vunpack.c.l.b16 %v729
          %v831 = vunpack.c.h.b16 %v729
          %v832 = vunpack.c.l.b16 %v730
          %v833 = vunpack.c.h.b16 %v730
          %v834 = vunpack.c.l.b16 %v731
          %v835 = vunpack.c.h.b16 %v731
          %v836 = vunpack.c.l.b16 %v732
          %v837 = vunpack.c.h.b16 %v732
          %v838 = vunpack.c.l.b16 %v733
          %v839 = vunpack.c.h.b16 %v733
          %v840 = vunpack.c.l.b16 %v734
          %v841 = vunpack.c.h.b16 %v734
          %v842 = vunpack.c.l.b16 %v735
          %v843 = vunpack.c.h.b16 %v735
          %v844 = vpack.c.b16 %v782, %v780
          %v845 = vpack.c.b16 %v783, %v781
          %v846 = vpack.c.b16 %v786, %v784
          %v847 = vpack.c.b16 %v787, %v785
          %v848 = vpack.c.b16 %v790, %v788
          %v849 = vpack.c.b16 %v791, %v789
          %v850 = vpack.c.b16 %v794, %v792
          %v851 = vpack.c.b16 %v795, %v793
          %v852 = vpack.c.b16 %v798, %v796
          %v853 = vpack.c.b16 %v799, %v797
          %v854 = vpack.c.b16 %v802, %v800
          %v855 = vpack.c.b16 %v803, %v801
          %v856 = vpack.c.b16 %v806, %v804
          %v857 = vpack.c.b16 %v807, %v805
          %v858 = vpack.c.b16 %v810, %v808
          %v859 = vpack.c.b16 %v811, %v809
          %v860 = vpack.c.b16 %v814, %v812
          %v861 = vpack.c.b16 %v815, %v813
          %v862 = vpack.c.b16 %v818, %v816
          %v863 = vpack.c.b16 %v819, %v817
          %v864 = vpack.c.b16 %v822, %v820
          %v865 = vpack.c.b16 %v823, %v821
          %v866 = vpack.c.b16 %v826, %v824
          %v867 = vpack.c.b16 %v827, %v825
          %v868 = vpack.c.b16 %v830, %v828
          %v869 = vpack.c.b16 %v831, %v829
          %v870 = vpack.c.b16 %v834, %v832
          %v871 = vpack.c.b16 %v835, %v833
          %v872 = vpack.c.b16 %v838, %v836
          %v873 = vpack.c.b16 %v839, %v837
          %v874 = vpack.c.b16 %v842, %v840
          %v875 = vpack.c.b16 %v843, %v841
          %908 = vmatprep.subr.bf16.mxu0 %v845
          %909 = vmatpush1.bf16.msra.mxu0 %v844
          %910 = vmatprep.subr.bf16.mxu0 %v847
          %911 = vmatpush1.bf16.msra.mxu0 %v846
          %912 = vmatprep.subr.bf16.mxu0 %v849
          %913 = vmatpush1.bf16.msra.mxu0 %v848
          %914 = vmatprep.subr.bf16.mxu0 %v851
          %915 = vmatpush1.bf16.msra.mxu0 %v850
          %916 = vmatprep.subr.bf16.mxu0 %v853
          %917 = vmatpush1.bf16.msra.mxu0 %v852
          %918 = vmatprep.subr.bf16.mxu0 %v855
          %919 = vmatpush1.bf16.msra.mxu0 %v854
          %920 = vmatprep.subr.bf16.mxu0 %v857
          %921 = vmatpush1.bf16.msra.mxu0 %v856
          %922 = vmatprep.subr.bf16.mxu0 %v859
          %923 = vmatpush1.bf16.msra.mxu0 %v858
          %924 = vmatprep.subr.bf16.mxu0 %v861
          %925 = vmatpush1.bf16.msra.mxu0 %v860
          %926 = vmatprep.subr.bf16.mxu0 %v863
          %927 = vmatpush1.bf16.msra.mxu0 %v862
          %928 = vmatprep.subr.bf16.mxu0 %v865
          %929 = vmatpush1.bf16.msra.mxu0 %v864
          %930 = vmatprep.subr.bf16.mxu0 %v867
          %931 = vmatpush1.bf16.msra.mxu0 %v866
          %932 = vmatprep.subr.bf16.mxu0 %v869
          %933 = vmatpush1.bf16.msra.mxu0 %v868
          %934 = vmatprep.subr.bf16.mxu0 %v871
          %935 = vmatpush1.bf16.msra.mxu0 %v870
          %936 = vmatprep.subr.bf16.mxu0 %v873
          %937 = vmatpush1.bf16.msra.mxu0 %v872
          %938 = vmatprep.subr.bf16.mxu0 %v875
          %939 = vmatpush1.bf16.msra.mxu0 %v874
          %940 = vmatprep.mubr.bf16.mxu0 %v703
          %941 = vmatmul.mubr.bf16.gmra.mrb[0].mxu0 %v702
          %v942 = vpop.f32.mrb[0].mxu0
          %v943 = vadd.f32 %v741, %v942
          %v944 = vpop.f32.mrb[0].mxu0
          %v945 = vadd.f32 %v745, %v944
          %v946 = vpop.f32.mrb[0].mxu0
          %v947 = vpop.f32.mrb[0].mxu0
          %948 = vdwg.mxu0
          %v949 = vtanh.pop %v943
          %v950 = vtanh.pop %v945
          %v951 = vadd.f32 %v949, %v700
          %v952 = vadd.f32 %v950, %v701
          %v953 = vpack.c.bf16 %v951, %v951
          %v954 = vpack.c.bf16 %v952, %v952
          %v955 = vld [vmem:[#allocation7] sm:$0xff]
          %v956 = vld [vmem:[#allocation7 + $0x8] sm:$0xff]
          %v957 = vld [vmem:[#allocation7 + $0x10] sm:$0xff]
          %v958 = vld [vmem:[#allocation7 + $0x18] sm:$0xff]
          %v959 = vld [vmem:[#allocation7 + $0x20] sm:$0xff]
          %v960 = vld [vmem:[#allocation7 + $0x28] sm:$0xff]
          %v961 = vld [vmem:[#allocation7 + $0x30] sm:$0xff]
          %v962 = vld [vmem:[#allocation7 + $0x38] sm:$0xff]
          %v963 = vld [vmem:[#allocation7 + $0x40] sm:$0xff]
          %v964 = vld [vmem:[#allocation7 + $0x48] sm:$0xff]
          %v965 = vld [vmem:[#allocation7 + $0x50] sm:$0xff]
          %v966 = vld [vmem:[#allocation7 + $0x58] sm:$0xff]
          %v967 = vld [vmem:[#allocation7 + $0x60] sm:$0xff]
          %v968 = vld [vmem:[#allocation7 + $0x68] sm:$0xff]
          %v969 = vld [vmem:[#allocation7 + $0x70] sm:$0xff]
          %v970 = vld [vmem:[#allocation7 + $0x78] sm:$0xff]
          %v971 = vld [vmem:[#allocation7 + $0x80] sm:$0xff]
          %v972 = vld [vmem:[#allocation7 + $0x88] sm:$0xff]
          %v973 = vld [vmem:[#allocation7 + $0x90] sm:$0xff]
          %v974 = vld [vmem:[#allocation7 + $0x98] sm:$0xff]
          %v975 = vld [vmem:[#allocation7 + $0xa0] sm:$0xff]
          %v976 = vld [vmem:[#allocation7 + $0xa8] sm:$0xff]
          %v977 = vld [vmem:[#allocation7 + $0xb0] sm:$0xff]
          %v978 = vld [vmem:[#allocation7 + $0xb8] sm:$0xff]
          %v979 = vld [vmem:[#allocation7 + $0xc0] sm:$0xff]
          %v980 = vld [vmem:[#allocation7 + $0xc8] sm:$0xff]
          %v981 = vld [vmem:[#allocation7 + $0xd0] sm:$0xff]
          %v982 = vld [vmem:[#allocation7 + $0xd8] sm:$0xff]
          %v983 = vld [vmem:[#allocation7 + $0xe0] sm:$0xff]
          %v984 = vld [vmem:[#allocation7 + $0xe8] sm:$0xff]
          %v985 = vld [vmem:[#allocation7 + $0xf0] sm:$0xff]
          %v986 = vld [vmem:[#allocation7 + $0xf8] sm:$0xff]
          %v987 = vld [vmem:[%s6] sm:$0x3]
          %v989 = vlaneseq
          %v990 = vshrl.u32 %v989, 7
          %v991 = vsub.s32 0, %v990
          %v992 = vrot.slane %v987, %v991
          %v993 = vlaneseq
          %v994 = vshrl.u32 %v993, 7
          %v995 = vsub.s32 1, %v994
          %v996 = vrot.slane %v987, %v995
          %v1031 = vunpack.c.l.b16 %v955
          %v1032 = vunpack.c.h.b16 %v955
          %v1033 = vunpack.c.l.b16 %v956
          %v1034 = vunpack.c.h.b16 %v956
          %v1035 = vunpack.c.l.b16 %v957
          %v1036 = vunpack.c.h.b16 %v957
          %v1037 = vunpack.c.l.b16 %v958
          %v1038 = vunpack.c.h.b16 %v958
          %v1039 = vunpack.c.l.b16 %v959
          %v1040 = vunpack.c.h.b16 %v959
          %v1041 = vunpack.c.l.b16 %v960
          %v1042 = vunpack.c.h.b16 %v960
          %v1043 = vunpack.c.l.b16 %v961
          %v1044 = vunpack.c.h.b16 %v961
          %v1045 = vunpack.c.l.b16 %v962
          %v1046 = vunpack.c.h.b16 %v962
          %v1047 = vunpack.c.l.b16 %v963
          %v1048 = vunpack.c.h.b16 %v963
          %v1049 = vunpack.c.l.b16 %v964
          %v1050 = vunpack.c.h.b16 %v964
          %v1051 = vunpack.c.l.b16 %v965
          %v1052 = vunpack.c.h.b16 %v965
          %v1053 = vunpack.c.l.b16 %v966
          %v1054 = vunpack.c.h.b16 %v966
          %v1055 = vunpack.c.l.b16 %v967
          %v1056 = vunpack.c.h.b16 %v967
          %v1057 = vunpack.c.l.b16 %v968
          %v1058 = vunpack.c.h.b16 %v968
          %v1059 = vunpack.c.l.b16 %v969
          %v1060 = vunpack.c.h.b16 %v969
          %v1061 = vunpack.c.l.b16 %v970
          %v1062 = vunpack.c.h.b16 %v970
          %v1063 = vunpack.c.l.b16 %v971
          %v1064 = vunpack.c.h.b16 %v971
          %v1065 = vunpack.c.l.b16 %v972
          %v1066 = vunpack.c.h.b16 %v972
          %v1067 = vunpack.c.l.b16 %v973
          %v1068 = vunpack.c.h.b16 %v973
          %v1069 = vunpack.c.l.b16 %v974
          %v1070 = vunpack.c.h.b16 %v974
          %v1071 = vunpack.c.l.b16 %v975
          %v1072 = vunpack.c.h.b16 %v975
          %v1073 = vunpack.c.l.b16 %v976
          %v1074 = vunpack.c.h.b16 %v976
          %v1075 = vunpack.c.l.b16 %v977
          %v1076 = vunpack.c.h.b16 %v977
          %v1077 = vunpack.c.l.b16 %v978
          %v1078 = vunpack.c.h.b16 %v978
          %v1079 = vunpack.c.l.b16 %v979
          %v1080 = vunpack.c.h.b16 %v979
          %v1081 = vunpack.c.l.b16 %v980
          %v1082 = vunpack.c.h.b16 %v980
          %v1083 = vunpack.c.l.b16 %v981
          %v1084 = vunpack.c.h.b16 %v981
          %v1085 = vunpack.c.l.b16 %v982
          %v1086 = vunpack.c.h.b16 %v982
          %v1087 = vunpack.c.l.b16 %v983
          %v1088 = vunpack.c.h.b16 %v983
          %v1089 = vunpack.c.l.b16 %v984
          %v1090 = vunpack.c.h.b16 %v984
          %v1091 = vunpack.c.l.b16 %v985
          %v1092 = vunpack.c.h.b16 %v985
          %v1093 = vunpack.c.l.b16 %v986
          %v1094 = vunpack.c.h.b16 %v986
          %v1095 = vpack.c.b16 %v1033, %v1031
          %v1096 = vpack.c.b16 %v1034, %v1032
          %v1097 = vpack.c.b16 %v1037, %v1035
          %v1098 = vpack.c.b16 %v1038, %v1036
          %v1099 = vpack.c.b16 %v1041, %v1039
          %v1100 = vpack.c.b16 %v1042, %v1040
          %v1101 = vpack.c.b16 %v1045, %v1043
          %v1102 = vpack.c.b16 %v1046, %v1044
          %v1103 = vpack.c.b16 %v1049, %v1047
          %v1104 = vpack.c.b16 %v1050, %v1048
          %v1105 = vpack.c.b16 %v1053, %v1051
          %v1106 = vpack.c.b16 %v1054, %v1052
          %v1107 = vpack.c.b16 %v1057, %v1055
          %v1108 = vpack.c.b16 %v1058, %v1056
          %v1109 = vpack.c.b16 %v1061, %v1059
          %v1110 = vpack.c.b16 %v1062, %v1060
          %v1111 = vpack.c.b16 %v1065, %v1063
          %v1112 = vpack.c.b16 %v1066, %v1064
          %v1113 = vpack.c.b16 %v1069, %v1067
          %v1114 = vpack.c.b16 %v1070, %v1068
          %v1115 = vpack.c.b16 %v1073, %v1071
          %v1116 = vpack.c.b16 %v1074, %v1072
          %v1117 = vpack.c.b16 %v1077, %v1075
          %v1118 = vpack.c.b16 %v1078, %v1076
          %v1119 = vpack.c.b16 %v1081, %v1079
          %v1120 = vpack.c.b16 %v1082, %v1080
          %v1121 = vpack.c.b16 %v1085, %v1083
          %v1122 = vpack.c.b16 %v1086, %v1084
          %v1123 = vpack.c.b16 %v1089, %v1087
          %v1124 = vpack.c.b16 %v1090, %v1088
          %v1125 = vpack.c.b16 %v1093, %v1091
          %v1126 = vpack.c.b16 %v1094, %v1092
          %1159 = vmatprep.subr.bf16.mxu0 %v1096
          %1160 = vmatpush1.bf16.msra.mxu0 %v1095
          %1161 = vmatprep.subr.bf16.mxu0 %v1098
          %1162 = vmatpush1.bf16.msra.mxu0 %v1097
          %1163 = vmatprep.subr.bf16.mxu0 %v1100
          %1164 = vmatpush1.bf16.msra.mxu0 %v1099
          %1165 = vmatprep.subr.bf16.mxu0 %v1102
          %1166 = vmatpush1.bf16.msra.mxu0 %v1101
          %1167 = vmatprep.subr.bf16.mxu0 %v1104
          %1168 = vmatpush1.bf16.msra.mxu0 %v1103
          %1169 = vmatprep.subr.bf16.mxu0 %v1106
          %1170 = vmatpush1.bf16.msra.mxu0 %v1105
          %1171 = vmatprep.subr.bf16.mxu0 %v1108
          %1172 = vmatpush1.bf16.msra.mxu0 %v1107
          %1173 = vmatprep.subr.bf16.mxu0 %v1110
          %1174 = vmatpush1.bf16.msra.mxu0 %v1109
          %1175 = vmatprep.subr.bf16.mxu0 %v1112
          %1176 = vmatpush1.bf16.msra.mxu0 %v1111
          %1177 = vmatprep.subr.bf16.mxu0 %v1114
          %1178 = vmatpush1.bf16.msra.mxu0 %v1113
          %1179 = vmatprep.subr.bf16.mxu0 %v1116
          %1180 = vmatpush1.bf16.msra.mxu0 %v1115
          %1181 = vmatprep.subr.bf16.mxu0 %v1118
          %1182 = vmatpush1.bf16.msra.mxu0 %v1117
          %1183 = vmatprep.subr.bf16.mxu0 %v1120
          %1184 = vmatpush1.bf16.msra.mxu0 %v1119
          %1185 = vmatprep.subr.bf16.mxu0 %v1122
          %1186 = vmatpush1.bf16.msra.mxu0 %v1121
          %1187 = vmatprep.subr.bf16.mxu0 %v1124
          %1188 = vmatpush1.bf16.msra.mxu0 %v1123
          %1189 = vmatprep.subr.bf16.mxu0 %v1126
          %1190 = vmatpush1.bf16.msra.mxu0 %v1125
          %1191 = vmatprep.mubr.bf16.mxu0 %v954
          %1192 = vmatmul.mubr.bf16.gmra.mrb[0].mxu0 %v953
          %v1193 = vpop.f32.mrb[0].mxu0
          %v1194 = vadd.f32 %v992, %v1193
          %v1195 = vpop.f32.mrb[0].mxu0
          %v1196 = vadd.f32 %v996, %v1195
          %v1197 = vpop.f32.mrb[0].mxu0
          %v1198 = vpop.f32.mrb[0].mxu0
          %1199 = vdwg.mxu0
          %v1200 = vadd.f32 %v1194, %v951
          %v1201 = vadd.f32 %v1196, %v952
          %v1202 = vpack.c.bf16 %v1200, %v1200
          %v1203 = vpack.c.bf16 %v1201, %v1201
          %v1206 = vunpack.c.l.b16 %v1202
          %v1207 = vunpack.c.l.b16 %v1203
          %v1208 = vpack.c.b16 %v1207, %v1206
          %1210 = vst [vmem:[#allocation2] sm:$0xff] %v1208
          %1211 = vst [vmem:[%s9] sm:$0xff] 0.0
          %1212 = vst [vmem:[%s9 + $0x8] sm:$0xff] 0.0
        $region80: #{network_forward.1} parent=55 // pred_fallthru
          _
        %v1213 = vld [vmem:[#allocation2] sm:$0xff]
        %v1214 = vld [vmem:[%s399] sm:$0xff]
        %v1215 = vld [vmem:[%s399 + $0x8] sm:$0xff]
        %v1216 = vld [vmem:[%s399 + $0x10] sm:$0xff]
        %v1217 = vld [vmem:[%s399 + $0x18] sm:$0xff]
        %v1218 = vld [vmem:[%s399 + $0x20] sm:$0xff]
        %v1219 = vld [vmem:[%s399 + $0x28] sm:$0xff]
        %v1220 = vld [vmem:[%s399 + $0x30] sm:$0xff]
        %v1221 = vld [vmem:[%s399 + $0x38] sm:$0xff]
        %v1222 = vld [vmem:[%s399 + $0x40] sm:$0xff]
        %v1223 = vld [vmem:[%s399 + $0x48] sm:$0xff]
        %v1224 = vld [vmem:[%s399 + $0x50] sm:$0xff]
        %v1225 = vld [vmem:[%s399 + $0x58] sm:$0xff]
        %v1226 = vld [vmem:[%s399 + $0x60] sm:$0xff]
        %v1227 = vld [vmem:[%s399 + $0x68] sm:$0xff]
        %v1228 = vld [vmem:[%s399 + $0x70] sm:$0xff]
        %v1229 = vld [vmem:[%s399 + $0x78] sm:$0xff]
        %v1230 = vld [vmem:[%s399 + $0x80] sm:$0xff]
        %v1231 = vld [vmem:[%s399 + $0x88] sm:$0xff]
        %v1232 = vld [vmem:[%s399 + $0x90] sm:$0xff]
        %v1233 = vld [vmem:[%s399 + $0x98] sm:$0xff]
        %v1234 = vld [vmem:[%s399 + $0xa0] sm:$0xff]
        %v1235 = vld [vmem:[%s399 + $0xa8] sm:$0xff]
        %v1236 = vld [vmem:[%s399 + $0xb0] sm:$0xff]
        %v1237 = vld [vmem:[%s399 + $0xb8] sm:$0xff]
        %v1238 = vld [vmem:[%s399 + $0xc0] sm:$0xff]
        %v1239 = vld [vmem:[%s399 + $0xc8] sm:$0xff]
        %v1240 = vld [vmem:[%s399 + $0xd0] sm:$0xff]
        %v1241 = vld [vmem:[%s399 + $0xd8] sm:$0xff]
        %v1242 = vld [vmem:[%s399 + $0xe0] sm:$0xff]
        %v1243 = vld [vmem:[%s399 + $0xe8] sm:$0xff]
        %v1244 = vld [vmem:[%s399 + $0xf0] sm:$0xff]
        %v1245 = vld [vmem:[%s399 + $0xf8] sm:$0xff]
        %v1246 = vld [vmem:[%s399 + $0x100] sm:$0xff]
        %v1247 = vld [vmem:[%s399 + $0x108] sm:$0xff]
        %v1248 = vld [vmem:[%s399 + $0x110] sm:$0xff]
        %v1249 = vld [vmem:[%s399 + $0x118] sm:$0xff]
        %v1250 = vld [vmem:[%s399 + $0x120] sm:$0xff]
        %v1251 = vld [vmem:[%s399 + $0x128] sm:$0xff]
        %v1252 = vld [vmem:[%s399 + $0x130] sm:$0xff]
        %v1253 = vld [vmem:[%s399 + $0x138] sm:$0xff]
        %v1254 = vld [vmem:[%s399 + $0x140] sm:$0xff]
        %v1255 = vld [vmem:[%s399 + $0x148] sm:$0xff]
        %v1256 = vld [vmem:[%s399 + $0x150] sm:$0xff]
        %v1257 = vld [vmem:[%s399 + $0x158] sm:$0xff]
        %v1258 = vld [vmem:[%s399 + $0x160] sm:$0xff]
        %v1259 = vld [vmem:[%s399 + $0x168] sm:$0xff]
        %v1260 = vld [vmem:[%s399 + $0x170] sm:$0xff]
        %v1261 = vld [vmem:[%s399 + $0x178] sm:$0xff]
        %v1262 = vld [vmem:[%s399 + $0x180] sm:$0xff]
        %v1263 = vld [vmem:[%s399 + $0x188] sm:$0xff]
        %v1264 = vld [vmem:[%s399 + $0x190] sm:$0xff]
        %v1265 = vld [vmem:[%s399 + $0x198] sm:$0xff]
        %v1266 = vld [vmem:[%s399 + $0x1a0] sm:$0xff]
        %v1267 = vld [vmem:[%s399 + $0x1a8] sm:$0xff]
        %v1268 = vld [vmem:[%s399 + $0x1b0] sm:$0xff]
        %v1269 = vld [vmem:[%s399 + $0x1b8] sm:$0xff]
        %v1270 = vld [vmem:[%s399 + $0x1c0] sm:$0xff]
        %v1271 = vld [vmem:[%s399 + $0x1c8] sm:$0xff]
        %v1272 = vld [vmem:[%s399 + $0x1d0] sm:$0xff]
        %v1273 = vld [vmem:[%s399 + $0x1d8] sm:$0xff]
        %v1274 = vld [vmem:[%s399 + $0x1e0] sm:$0xff]
        %v1275 = vld [vmem:[%s399 + $0x1e8] sm:$0xff]
        %v1276 = vld [vmem:[%s399 + $0x1f0] sm:$0xff]
        %v1277 = vld [vmem:[%s399 + $0x1f8] sm:$0xff]
        %v1279 = vunpack.c.l.b16 %v1213
        %v1280 = vunpack.c.h.b16 %v1213
        %v1281 = vpack.c.b16 %v1279, %v1279
        %v1282 = vpack.c.b16 %v1280, %v1280
        %v1349 = vunpack.c.l.b16 %v1214
        %v1350 = vunpack.c.h.b16 %v1214
        %v1351 = vunpack.c.l.b16 %v1215
        %v1352 = vunpack.c.h.b16 %v1215
        %v1353 = vunpack.c.l.b16 %v1216
        %v1354 = vunpack.c.h.b16 %v1216
        %v1355 = vunpack.c.l.b16 %v1217
        %v1356 = vunpack.c.h.b16 %v1217
        %v1357 = vunpack.c.l.b16 %v1218
        %v1358 = vunpack.c.h.b16 %v1218
        %v1359 = vunpack.c.l.b16 %v1219
        %v1360 = vunpack.c.h.b16 %v1219
        %v1361 = vunpack.c.l.b16 %v1220
        %v1362 = vunpack.c.h.b16 %v1220
        %v1363 = vunpack.c.l.b16 %v1221
        %v1364 = vunpack.c.h.b16 %v1221
        %v1365 = vunpack.c.l.b16 %v1222
        %v1366 = vunpack.c.h.b16 %v1222
        %v1367 = vunpack.c.l.b16 %v1223
        %v1368 = vunpack.c.h.b16 %v1223
        %v1369 = vunpack.c.l.b16 %v1224
        %v1370 = vunpack.c.h.b16 %v1224
        %v1371 = vunpack.c.l.b16 %v1225
        %v1372 = vunpack.c.h.b16 %v1225
        %v1373 = vunpack.c.l.b16 %v1226
        %v1374 = vunpack.c.h.b16 %v1226
        %v1375 = vunpack.c.l.b16 %v1227
        %v1376 = vunpack.c.h.b16 %v1227
        %v1377 = vunpack.c.l.b16 %v1228
        %v1378 = vunpack.c.h.b16 %v1228
        %v1379 = vunpack.c.l.b16 %v1229
        %v1380 = vunpack.c.h.b16 %v1229
        %v1381 = vunpack.c.l.b16 %v1230
        %v1382 = vunpack.c.h.b16 %v1230
        %v1383 = vunpack.c.l.b16 %v1231
        %v1384 = vunpack.c.h.b16 %v1231
        %v1385 = vunpack.c.l.b16 %v1232
        %v1386 = vunpack.c.h.b16 %v1232
        %v1387 = vunpack.c.l.b16 %v1233
        %v1388 = vunpack.c.h.b16 %v1233
        %v1389 = vunpack.c.l.b16 %v1234
        %v1390 = vunpack.c.h.b16 %v1234
        %v1391 = vunpack.c.l.b16 %v1235
        %v1392 = vunpack.c.h.b16 %v1235
        %v1393 = vunpack.c.l.b16 %v1236
        %v1394 = vunpack.c.h.b16 %v1236
        %v1395 = vunpack.c.l.b16 %v1237
        %v1396 = vunpack.c.h.b16 %v1237
        %v1397 = vunpack.c.l.b16 %v1238
        %v1398 = vunpack.c.h.b16 %v1238
        %v1399 = vunpack.c.l.b16 %v1239
        %v1400 = vunpack.c.h.b16 %v1239
        %v1401 = vunpack.c.l.b16 %v1240
        %v1402 = vunpack.c.h.b16 %v1240
        %v1403 = vunpack.c.l.b16 %v1241
        %v1404 = vunpack.c.h.b16 %v1241
        %v1405 = vunpack.c.l.b16 %v1242
        %v1406 = vunpack.c.h.b16 %v1242
        %v1407 = vunpack.c.l.b16 %v1243
        %v1408 = vunpack.c.h.b16 %v1243
        %v1409 = vunpack.c.l.b16 %v1244
        %v1410 = vunpack.c.h.b16 %v1244
        %v1411 = vunpack.c.l.b16 %v1245
        %v1412 = vunpack.c.h.b16 %v1245
        %v1413 = vunpack.c.l.b16 %v1246
        %v1414 = vunpack.c.h.b16 %v1246
        %v1415 = vunpack.c.l.b16 %v1247
        %v1416 = vunpack.c.h.b16 %v1247
        %v1417 = vunpack.c.l.b16 %v1248
        %v1418 = vunpack.c.h.b16 %v1248
        %v1419 = vunpack.c.l.b16 %v1249
        %v1420 = vunpack.c.h.b16 %v1249
        %v1421 = vunpack.c.l.b16 %v1250
        %v1422 = vunpack.c.h.b16 %v1250
        %v1423 = vunpack.c.l.b16 %v1251
        %v1424 = vunpack.c.h.b16 %v1251
        %v1425 = vunpack.c.l.b16 %v1252
        %v1426 = vunpack.c.h.b16 %v1252
        %v1427 = vunpack.c.l.b16 %v1253
        %v1428 = vunpack.c.h.b16 %v1253
        %v1429 = vunpack.c.l.b16 %v1254
        %v1430 = vunpack.c.h.b16 %v1254
        %v1431 = vunpack.c.l.b16 %v1255
        %v1432 = vunpack.c.h.b16 %v1255
        %v1433 = vunpack.c.l.b16 %v1256
        %v1434 = vunpack.c.h.b16 %v1256
        %v1435 = vunpack.c.l.b16 %v1257
        %v1436 = vunpack.c.h.b16 %v1257
        %v1437 = vunpack.c.l.b16 %v1258
        %v1438 = vunpack.c.h.b16 %v1258
        %v1439 = vunpack.c.l.b16 %v1259
        %v1440 = vunpack.c.h.b16 %v1259
        %v1441 = vunpack.c.l.b16 %v1260
        %v1442 = vunpack.c.h.b16 %v1260
        %v1443 = vunpack.c.l.b16 %v1261
        %v1444 = vunpack.c.h.b16 %v1261
        %v1445 = vunpack.c.l.b16 %v1262
        %v1446 = vunpack.c.h.b16 %v1262
        %v1447 = vunpack.c.l.b16 %v1263
        %v1448 = vunpack.c.h.b16 %v1263
        %v1449 = vunpack.c.l.b16 %v1264
        %v1450 = vunpack.c.h.b16 %v1264
        %v1451 = vunpack.c.l.b16 %v1265
        %v1452 = vunpack.c.h.b16 %v1265
        %v1453 = vunpack.c.l.b16 %v1266
        %v1454 = vunpack.c.h.b16 %v1266
        %v1455 = vunpack.c.l.b16 %v1267
        %v1456 = vunpack.c.h.b16 %v1267
        %v1457 = vunpack.c.l.b16 %v1268
        %v1458 = vunpack.c.h.b16 %v1268
        %v1459 = vunpack.c.l.b16 %v1269
        %v1460 = vunpack.c.h.b16 %v1269
        %v1461 = vunpack.c.l.b16 %v1270
        %v1462 = vunpack.c.h.b16 %v1270
        %v1463 = vunpack.c.l.b16 %v1271
        %v1464 = vunpack.c.h.b16 %v1271
        %v1465 = vunpack.c.l.b16 %v1272
        %v1466 = vunpack.c.h.b16 %v1272
        %v1467 = vunpack.c.l.b16 %v1273
        %v1468 = vunpack.c.h.b16 %v1273
        %v1469 = vunpack.c.l.b16 %v1274
        %v1470 = vunpack.c.h.b16 %v1274
        %v1471 = vunpack.c.l.b16 %v1275
        %v1472 = vunpack.c.h.b16 %v1275
        %v1473 = vunpack.c.l.b16 %v1276
        %v1474 = vunpack.c.h.b16 %v1276
        %v1475 = vunpack.c.l.b16 %v1277
        %v1476 = vunpack.c.h.b16 %v1277
        %v1477 = vpack.c.b16 %v1353, %v1349
        %v1478 = vpack.c.b16 %v1354, %v1350
        %v1479 = vpack.c.b16 %v1355, %v1351
        %v1480 = vpack.c.b16 %v1356, %v1352
        %v1481 = vpack.c.b16 %v1361, %v1357
        %v1482 = vpack.c.b16 %v1362, %v1358
        %v1483 = vpack.c.b16 %v1363, %v1359
        %v1484 = vpack.c.b16 %v1364, %v1360
        %v1485 = vpack.c.b16 %v1369, %v1365
        %v1486 = vpack.c.b16 %v1370, %v1366
        %v1487 = vpack.c.b16 %v1371, %v1367
        %v1488 = vpack.c.b16 %v1372, %v1368
        %v1489 = vpack.c.b16 %v1377, %v1373
        %v1490 = vpack.c.b16 %v1378, %v1374
        %v1491 = vpack.c.b16 %v1379, %v1375
        %v1492 = vpack.c.b16 %v1380, %v1376
        %v1493 = vpack.c.b16 %v1385, %v1381
        %v1494 = vpack.c.b16 %v1386, %v1382
        %v1495 = vpack.c.b16 %v1387, %v1383
        %v1496 = vpack.c.b16 %v1388, %v1384
        %v1497 = vpack.c.b16 %v1393, %v1389
        %v1498 = vpack.c.b16 %v1394, %v1390
        %v1499 = vpack.c.b16 %v1395, %v1391
        %v1500 = vpack.c.b16 %v1396, %v1392
        %v1501 = vpack.c.b16 %v1401, %v1397
        %v1502 = vpack.c.b16 %v1402, %v1398
        %v1503 = vpack.c.b16 %v1403, %v1399
        %v1504 = vpack.c.b16 %v1404, %v1400
        %v1505 = vpack.c.b16 %v1409, %v1405
        %v1506 = vpack.c.b16 %v1410, %v1406
        %v1507 = vpack.c.b16 %v1411, %v1407
        %v1508 = vpack.c.b16 %v1412, %v1408
        %v1509 = vpack.c.b16 %v1417, %v1413
        %v1510 = vpack.c.b16 %v1418, %v1414
        %v1511 = vpack.c.b16 %v1419, %v1415
        %v1512 = vpack.c.b16 %v1420, %v1416
        %v1513 = vpack.c.b16 %v1425, %v1421
        %v1514 = vpack.c.b16 %v1426, %v1422
        %v1515 = vpack.c.b16 %v1427, %v1423
        %v1516 = vpack.c.b16 %v1428, %v1424
        %v1517 = vpack.c.b16 %v1433, %v1429
        %v1518 = vpack.c.b16 %v1434, %v1430
        %v1519 = vpack.c.b16 %v1435, %v1431
        %v1520 = vpack.c.b16 %v1436, %v1432
        %v1521 = vpack.c.b16 %v1441, %v1437
        %v1522 = vpack.c.b16 %v1442, %v1438
        %v1523 = vpack.c.b16 %v1443, %v1439
        %v1524 = vpack.c.b16 %v1444, %v1440
        %v1525 = vpack.c.b16 %v1449, %v1445
        %v1526 = vpack.c.b16 %v1450, %v1446
        %v1527 = vpack.c.b16 %v1451, %v1447
        %v1528 = vpack.c.b16 %v1452, %v1448
        %v1529 = vpack.c.b16 %v1457, %v1453
        %v1530 = vpack.c.b16 %v1458, %v1454
        %v1531 = vpack.c.b16 %v1459, %v1455
        %v1532 = vpack.c.b16 %v1460, %v1456
        %v1533 = vpack.c.b16 %v1465, %v1461
        %v1534 = vpack.c.b16 %v1466, %v1462
        %v1535 = vpack.c.b16 %v1467, %v1463
        %v1536 = vpack.c.b16 %v1468, %v1464
        %v1537 = vpack.c.b16 %v1473, %v1469
        %v1538 = vpack.c.b16 %v1474, %v1470
        %v1539 = vpack.c.b16 %v1475, %v1471
        %v1540 = vpack.c.b16 %v1476, %v1472
        %1605 = vmatprep.subr.bf16.mxu0 %v1478
        %1606 = vmatpush1.bf16.msra.mxu0 %v1477
        %1607 = vmatprep.subr.bf16.mxu0 %v1482
        %1608 = vmatpush1.bf16.msra.mxu0 %v1481
        %1609 = vmatprep.subr.bf16.mxu0 %v1486
        %1610 = vmatpush1.bf16.msra.mxu0 %v1485
        %1611 = vmatprep.subr.bf16.mxu0 %v1490
        %1612 = vmatpush1.bf16.msra.mxu0 %v1489
        %1613 = vmatprep.subr.bf16.mxu0 %v1494
        %1614 = vmatpush1.bf16.msra.mxu0 %v1493
        %1615 = vmatprep.subr.bf16.mxu0 %v1498
        %1616 = vmatpush1.bf16.msra.mxu0 %v1497
        %1617 = vmatprep.subr.bf16.mxu0 %v1502
        %1618 = vmatpush1.bf16.msra.mxu0 %v1501
        %1619 = vmatprep.subr.bf16.mxu0 %v1506
        %1620 = vmatpush1.bf16.msra.mxu0 %v1505
        %1621 = vmatprep.subr.bf16.mxu0 %v1510
        %1622 = vmatpush1.bf16.msra.mxu0 %v1509
        %1623 = vmatprep.subr.bf16.mxu0 %v1514
        %1624 = vmatpush1.bf16.msra.mxu0 %v1513
        %1625 = vmatprep.subr.bf16.mxu0 %v1518
        %1626 = vmatpush1.bf16.msra.mxu0 %v1517
        %1627 = vmatprep.subr.bf16.mxu0 %v1522
        %1628 = vmatpush1.bf16.msra.mxu0 %v1521
        %1629 = vmatprep.subr.bf16.mxu0 %v1526
        %1630 = vmatpush1.bf16.msra.mxu0 %v1525
        %1631 = vmatprep.subr.bf16.mxu0 %v1530
        %1632 = vmatpush1.bf16.msra.mxu0 %v1529
        %1633 = vmatprep.subr.bf16.mxu0 %v1534
        %1634 = vmatpush1.bf16.msra.mxu0 %v1533
        %1635 = vmatprep.subr.bf16.mxu0 %v1538
        %1636 = vmatpush1.bf16.msra.mxu0 %v1537
        %1637 = vmatprep.mubr.bf16.mxu0 %v1282
        %1638 = vmatmul.mubr.bf16.gmra.mrb[0].mxu0 %v1281
        %v1639 = vpop.f32.mrb[0].mxu0
        %v1640 = vadd.f32 0.0, %v1639
        %v1641 = vpop.f32.mrb[0].mxu0
        %v1642 = vadd.f32 0.0, %v1641
        %v1643 = vpop.f32.mrb[0].mxu0
        %v1644 = vpop.f32.mrb[0].mxu0
        %1645 = vdwg.mxu0
        %1646 = vmatprep.subr.bf16.mxu0 %v1480
        %1647 = vmatpush1.bf16.msra.mxu0 %v1479
        %1648 = vmatprep.subr.bf16.mxu0 %v1484
        %1649 = vmatpush1.bf16.msra.mxu0 %v1483
        %1650 = vmatprep.subr.bf16.mxu0 %v1488
        %1651 = vmatpush1.bf16.msra.mxu0 %v1487
        %1652 = vmatprep.subr.bf16.mxu0 %v1492
        %1653 = vmatpush1.bf16.msra.mxu0 %v1491
        %1654 = vmatprep.subr.bf16.mxu0 %v1496
        %1655 = vmatpush1.bf16.msra.mxu0 %v1495
        %1656 = vmatprep.subr.bf16.mxu0 %v1500
        %1657 = vmatpush1.bf16.msra.mxu0 %v1499
        %1658 = vmatprep.subr.bf16.mxu0 %v1504
        %1659 = vmatpush1.bf16.msra.mxu0 %v1503
        %1660 = vmatprep.subr.bf16.mxu0 %v1508
        %1661 = vmatpush1.bf16.msra.mxu0 %v1507
        %1662 = vmatprep.subr.bf16.mxu0 %v1512
        %1663 = vmatpush1.bf16.msra.mxu0 %v1511
        %1664 = vmatprep.subr.bf16.mxu0 %v1516
        %1665 = vmatpush1.bf16.msra.mxu0 %v1515
        %1666 = vmatprep.subr.bf16.mxu0 %v1520
        %1667 = vmatpush1.bf16.msra.mxu0 %v1519
        %1668 = vmatprep.subr.bf16.mxu0 %v1524
        %1669 = vmatpush1.bf16.msra.mxu0 %v1523
        %1670 = vmatprep.subr.bf16.mxu0 %v1528
        %1671 = vmatpush1.bf16.msra.mxu0 %v1527
        %1672 = vmatprep.subr.bf16.mxu0 %v1532
        %1673 = vmatpush1.bf16.msra.mxu0 %v1531
        %1674 = vmatprep.subr.bf16.mxu0 %v1536
        %1675 = vmatpush1.bf16.msra.mxu0 %v1535
        %1676 = vmatprep.subr.bf16.mxu0 %v1540
        %1677 = vmatpush1.bf16.msra.mxu0 %v1539
        %1678 = vmatprep.mubr.bf16.mxu0 %v1282
        %1679 = vmatmul.mubr.bf16.gmra.mrb[0].mxu0 %v1281
        %v1680 = vpop.f32.mrb[0].mxu0
        %v1681 = vadd.f32 0.0, %v1680
        %v1682 = vpop.f32.mrb[0].mxu0
        %v1683 = vadd.f32 0.0, %v1682
        %v1684 = vpop.f32.mrb[0].mxu0
        %v1685 = vpop.f32.mrb[0].mxu0
        %1686 = vdwg.mxu0
        %v1687 = vmul.f32 %v1640, 1.442695
        %v1688 = vpow.pop %v1687
        %v1689 = vmul.f32 %v1642, 1.442695
        %v1690 = vpow.pop %v1689
        %v1691 = vmul.f32 %v1681, 1.442695
        %v1692 = vpow.pop %v1691
        %v1693 = vmul.f32 %v1683, 1.442695
        %v1694 = vpow.pop %v1693
        %v1695 = vld [vmem:[%s9] sm:$0xff]
        %v1696 = vld [vmem:[%s9 + $0x8] sm:$0xff]
        %v1697 = vpack.c.bf16 %v1688, %v1688
        %v1698 = vpack.c.bf16 %v1690, %v1690
        %v1699 = vpack.c.bf16 %v1692, %v1692
        %v1700 = vpack.c.bf16 %v1694, %v1694
        %v1701 = vld [vmem:[%s408] sm:$0xff]
        %v1702 = vld [vmem:[%s408 + $0x8] sm:$0xff]
        %v1703 = vld [vmem:[%s408 + $0x10] sm:$0xff]
        %v1704 = vld [vmem:[%s408 + $0x18] sm:$0xff]
        %v1705 = vld [vmem:[%s408 + $0x20] sm:$0xff]
        %v1706 = vld [vmem:[%s408 + $0x28] sm:$0xff]
        %v1707 = vld [vmem:[%s408 + $0x30] sm:$0xff]
        %v1708 = vld [vmem:[%s408 + $0x38] sm:$0xff]
        %v1709 = vld [vmem:[%s408 + $0x40] sm:$0xff]
        %v1710 = vld [vmem:[%s408 + $0x48] sm:$0xff]
        %v1711 = vld [vmem:[%s408 + $0x50] sm:$0xff]
        %v1712 = vld [vmem:[%s408 + $0x58] sm:$0xff]
        %v1713 = vld [vmem:[%s408 + $0x60] sm:$0xff]
        %v1714 = vld [vmem:[%s408 + $0x68] sm:$0xff]
        %v1715 = vld [vmem:[%s408 + $0x70] sm:$0xff]
        %v1716 = vld [vmem:[%s408 + $0x78] sm:$0xff]
        %v1717 = vld [vmem:[%s408 + $0x80] sm:$0xff]
        %v1718 = vld [vmem:[%s408 + $0x88] sm:$0xff]
        %v1719 = vld [vmem:[%s408 + $0x90] sm:$0xff]
        %v1720 = vld [vmem:[%s408 + $0x98] sm:$0xff]
        %v1721 = vld [vmem:[%s408 + $0xa0] sm:$0xff]
        %v1722 = vld [vmem:[%s408 + $0xa8] sm:$0xff]
        %v1723 = vld [vmem:[%s408 + $0xb0] sm:$0xff]
        %v1724 = vld [vmem:[%s408 + $0xb8] sm:$0xff]
        %v1725 = vld [vmem:[%s408 + $0xc0] sm:$0xff]
        %v1726 = vld [vmem:[%s408 + $0xc8] sm:$0xff]
        %v1727 = vld [vmem:[%s408 + $0xd0] sm:$0xff]
        %v1728 = vld [vmem:[%s408 + $0xd8] sm:$0xff]
        %v1729 = vld [vmem:[%s408 + $0xe0] sm:$0xff]
        %v1730 = vld [vmem:[%s408 + $0xe8] sm:$0xff]
        %v1731 = vld [vmem:[%s408 + $0xf0] sm:$0xff]
        %v1732 = vld [vmem:[%s408 + $0xf8] sm:$0xff]
        %v1733 = vld [vmem:[%s408 + $0x100] sm:$0xff]
        %v1734 = vld [vmem:[%s408 + $0x108] sm:$0xff]
        %v1735 = vld [vmem:[%s408 + $0x110] sm:$0xff]
        %v1736 = vld [vmem:[%s408 + $0x118] sm:$0xff]
        %v1737 = vld [vmem:[%s408 + $0x120] sm:$0xff]
        %v1738 = vld [vmem:[%s408 + $0x128] sm:$0xff]
        %v1739 = vld [vmem:[%s408 + $0x130] sm:$0xff]
        %v1740 = vld [vmem:[%s408 + $0x138] sm:$0xff]
        %v1741 = vld [vmem:[%s408 + $0x140] sm:$0xff]
        %v1742 = vld [vmem:[%s408 + $0x148] sm:$0xff]
        %v1743 = vld [vmem:[%s408 + $0x150] sm:$0xff]
        %v1744 = vld [vmem:[%s408 + $0x158] sm:$0xff]
        %v1745 = vld [vmem:[%s408 + $0x160] sm:$0xff]
        %v1746 = vld [vmem:[%s408 + $0x168] sm:$0xff]
        %v1747 = vld [vmem:[%s408 + $0x170] sm:$0xff]
        %v1748 = vld [vmem:[%s408 + $0x178] sm:$0xff]
        %v1749 = vld [vmem:[%s408 + $0x180] sm:$0xff]
        %v1750 = vld [vmem:[%s408 + $0x188] sm:$0xff]
        %v1751 = vld [vmem:[%s408 + $0x190] sm:$0xff]
        %v1752 = vld [vmem:[%s408 + $0x198] sm:$0xff]
        %v1753 = vld [vmem:[%s408 + $0x1a0] sm:$0xff]
        %v1754 = vld [vmem:[%s408 + $0x1a8] sm:$0xff]
        %v1755 = vld [vmem:[%s408 + $0x1b0] sm:$0xff]
        %v1756 = vld [vmem:[%s408 + $0x1b8] sm:$0xff]
        %v1757 = vld [vmem:[%s408 + $0x1c0] sm:$0xff]
        %v1758 = vld [vmem:[%s408 + $0x1c8] sm:$0xff]
        %v1759 = vld [vmem:[%s408 + $0x1d0] sm:$0xff]
        %v1760 = vld [vmem:[%s408 + $0x1d8] sm:$0xff]
        %v1761 = vld [vmem:[%s408 + $0x1e0] sm:$0xff]
        %v1762 = vld [vmem:[%s408 + $0x1e8] sm:$0xff]
        %v1763 = vld [vmem:[%s408 + $0x1f0] sm:$0xff]
        %v1764 = vld [vmem:[%s408 + $0x1f8] sm:$0xff]
        %v1829 = vunpack.c.l.b16 %v1701
        %v1830 = vunpack.c.h.b16 %v1701
        %v1831 = vunpack.c.l.b16 %v1702
        %v1832 = vunpack.c.h.b16 %v1702
        %v1833 = vunpack.c.l.b16 %v1703
        %v1834 = vunpack.c.h.b16 %v1703
        %v1835 = vunpack.c.l.b16 %v1704
        %v1836 = vunpack.c.h.b16 %v1704
        %v1837 = vunpack.c.l.b16 %v1705
        %v1838 = vunpack.c.h.b16 %v1705
        %v1839 = vunpack.c.l.b16 %v1706
        %v1840 = vunpack.c.h.b16 %v1706
        %v1841 = vunpack.c.l.b16 %v1707
        %v1842 = vunpack.c.h.b16 %v1707
        %v1843 = vunpack.c.l.b16 %v1708
        %v1844 = vunpack.c.h.b16 %v1708
        %v1845 = vunpack.c.l.b16 %v1709
        %v1846 = vunpack.c.h.b16 %v1709
        %v1847 = vunpack.c.l.b16 %v1710
        %v1848 = vunpack.c.h.b16 %v1710
        %v1849 = vunpack.c.l.b16 %v1711
        %v1850 = vunpack.c.h.b16 %v1711
        %v1851 = vunpack.c.l.b16 %v1712
        %v1852 = vunpack.c.h.b16 %v1712
        %v1853 = vunpack.c.l.b16 %v1713
        %v1854 = vunpack.c.h.b16 %v1713
        %v1855 = vunpack.c.l.b16 %v1714
        %v1856 = vunpack.c.h.b16 %v1714
        %v1857 = vunpack.c.l.b16 %v1715
        %v1858 = vunpack.c.h.b16 %v1715
        %v1859 = vunpack.c.l.b16 %v1716
        %v1860 = vunpack.c.h.b16 %v1716
        %v1861 = vunpack.c.l.b16 %v1717
        %v1862 = vunpack.c.h.b16 %v1717
        %v1863 = vunpack.c.l.b16 %v1718
        %v1864 = vunpack.c.h.b16 %v1718
        %v1865 = vunpack.c.l.b16 %v1719
        %v1866 = vunpack.c.h.b16 %v1719
        %v1867 = vunpack.c.l.b16 %v1720
        %v1868 = vunpack.c.h.b16 %v1720
        %v1869 = vunpack.c.l.b16 %v1721
        %v1870 = vunpack.c.h.b16 %v1721
        %v1871 = vunpack.c.l.b16 %v1722
        %v1872 = vunpack.c.h.b16 %v1722
        %v1873 = vunpack.c.l.b16 %v1723
        %v1874 = vunpack.c.h.b16 %v1723
        %v1875 = vunpack.c.l.b16 %v1724
        %v1876 = vunpack.c.h.b16 %v1724
        %v1877 = vunpack.c.l.b16 %v1725
        %v1878 = vunpack.c.h.b16 %v1725
        %v1879 = vunpack.c.l.b16 %v1726
        %v1880 = vunpack.c.h.b16 %v1726
        %v1881 = vunpack.c.l.b16 %v1727
        %v1882 = vunpack.c.h.b16 %v1727
        %v1883 = vunpack.c.l.b16 %v1728
        %v1884 = vunpack.c.h.b16 %v1728
        %v1885 = vunpack.c.l.b16 %v1729
        %v1886 = vunpack.c.h.b16 %v1729
        %v1887 = vunpack.c.l.b16 %v1730
        %v1888 = vunpack.c.h.b16 %v1730
        %v1889 = vunpack.c.l.b16 %v1731
        %v1890 = vunpack.c.h.b16 %v1731
        %v1891 = vunpack.c.l.b16 %v1732
        %v1892 = vunpack.c.h.b16 %v1732
        %v1893 = vunpack.c.l.b16 %v1733
        %v1894 = vunpack.c.h.b16 %v1733
        %v1895 = vunpack.c.l.b16 %v1734
        %v1896 = vunpack.c.h.b16 %v1734
        %v1897 = vunpack.c.l.b16 %v1735
        %v1898 = vunpack.c.h.b16 %v1735
        %v1899 = vunpack.c.l.b16 %v1736
        %v1900 = vunpack.c.h.b16 %v1736
        %v1901 = vunpack.c.l.b16 %v1737
        %v1902 = vunpack.c.h.b16 %v1737
        %v1903 = vunpack.c.l.b16 %v1738
        %v1904 = vunpack.c.h.b16 %v1738
        %v1905 = vunpack.c.l.b16 %v1739
        %v1906 = vunpack.c.h.b16 %v1739
        %v1907 = vunpack.c.l.b16 %v1740
        %v1908 = vunpack.c.h.b16 %v1740
        %v1909 = vunpack.c.l.b16 %v1741
        %v1910 = vunpack.c.h.b16 %v1741
        %v1911 = vunpack.c.l.b16 %v1742
        %v1912 = vunpack.c.h.b16 %v1742
        %v1913 = vunpack.c.l.b16 %v1743
        %v1914 = vunpack.c.h.b16 %v1743
        %v1915 = vunpack.c.l.b16 %v1744
        %v1916 = vunpack.c.h.b16 %v1744
        %v1917 = vunpack.c.l.b16 %v1745
        %v1918 = vunpack.c.h.b16 %v1745
        %v1919 = vunpack.c.l.b16 %v1746
        %v1920 = vunpack.c.h.b16 %v1746
        %v1921 = vunpack.c.l.b16 %v1747
        %v1922 = vunpack.c.h.b16 %v1747
        %v1923 = vunpack.c.l.b16 %v1748
        %v1924 = vunpack.c.h.b16 %v1748
        %v1925 = vunpack.c.l.b16 %v1749
        %v1926 = vunpack.c.h.b16 %v1749
        %v1927 = vunpack.c.l.b16 %v1750
        %v1928 = vunpack.c.h.b16 %v1750
        %v1929 = vunpack.c.l.b16 %v1751
        %v1930 = vunpack.c.h.b16 %v1751
        %v1931 = vunpack.c.l.b16 %v1752
        %v1932 = vunpack.c.h.b16 %v1752
        %v1933 = vunpack.c.l.b16 %v1753
        %v1934 = vunpack.c.h.b16 %v1753
        %v1935 = vunpack.c.l.b16 %v1754
        %v1936 = vunpack.c.h.b16 %v1754
        %v1937 = vunpack.c.l.b16 %v1755
        %v1938 = vunpack.c.h.b16 %v1755
        %v1939 = vunpack.c.l.b16 %v1756
        %v1940 = vunpack.c.h.b16 %v1756
        %v1941 = vunpack.c.l.b16 %v1757
        %v1942 = vunpack.c.h.b16 %v1757
        %v1943 = vunpack.c.l.b16 %v1758
        %v1944 = vunpack.c.h.b16 %v1758
        %v1945 = vunpack.c.l.b16 %v1759
        %v1946 = vunpack.c.h.b16 %v1759
        %v1947 = vunpack.c.l.b16 %v1760
        %v1948 = vunpack.c.h.b16 %v1760
        %v1949 = vunpack.c.l.b16 %v1761
        %v1950 = vunpack.c.h.b16 %v1761
        %v1951 = vunpack.c.l.b16 %v1762
        %v1952 = vunpack.c.h.b16 %v1762
        %v1953 = vunpack.c.l.b16 %v1763
        %v1954 = vunpack.c.h.b16 %v1763
        %v1955 = vunpack.c.l.b16 %v1764
        %v1956 = vunpack.c.h.b16 %v1764
        %v1957 = vpack.c.b16 %v1831, %v1829
        %v1958 = vpack.c.b16 %v1832, %v1830
        %v1959 = vpack.c.b16 %v1835, %v1833
        %v1960 = vpack.c.b16 %v1836, %v1834
        %v1961 = vpack.c.b16 %v1839, %v1837
        %v1962 = vpack.c.b16 %v1840, %v1838
        %v1963 = vpack.c.b16 %v1843, %v1841
        %v1964 = vpack.c.b16 %v1844, %v1842
        %v1965 = vpack.c.b16 %v1847, %v1845
        %v1966 = vpack.c.b16 %v1848, %v1846
        %v1967 = vpack.c.b16 %v1851, %v1849
        %v1968 = vpack.c.b16 %v1852, %v1850
        %v1969 = vpack.c.b16 %v1855, %v1853
        %v1970 = vpack.c.b16 %v1856, %v1854
        %v1971 = vpack.c.b16 %v1859, %v1857
        %v1972 = vpack.c.b16 %v1860, %v1858
        %v1973 = vpack.c.b16 %v1863, %v1861
        %v1974 = vpack.c.b16 %v1864, %v1862
        %v1975 = vpack.c.b16 %v1867, %v1865
        %v1976 = vpack.c.b16 %v1868, %v1866
        %v1977 = vpack.c.b16 %v1871, %v1869
        %v1978 = vpack.c.b16 %v1872, %v1870
        %v1979 = vpack.c.b16 %v1875, %v1873
        %v1980 = vpack.c.b16 %v1876, %v1874
        %v1981 = vpack.c.b16 %v1879, %v1877
        %v1982 = vpack.c.b16 %v1880, %v1878
        %v1983 = vpack.c.b16 %v1883, %v1881
        %v1984 = vpack.c.b16 %v1884, %v1882
        %v1985 = vpack.c.b16 %v1887, %v1885
        %v1986 = vpack.c.b16 %v1888, %v1886
        %v1987 = vpack.c.b16 %v1891, %v1889
        %v1988 = vpack.c.b16 %v1892, %v1890
        %v1989 = vpack.c.b16 %v1895, %v1893
        %v1990 = vpack.c.b16 %v1896, %v1894
        %v1991 = vpack.c.b16 %v1899, %v1897
        %v1992 = vpack.c.b16 %v1900, %v1898
        %v1993 = vpack.c.b16 %v1903, %v1901
        %v1994 = vpack.c.b16 %v1904, %v1902
        %v1995 = vpack.c.b16 %v1907, %v1905
        %v1996 = vpack.c.b16 %v1908, %v1906
        %v1997 = vpack.c.b16 %v1911, %v1909
        %v1998 = vpack.c.b16 %v1912, %v1910
        %v1999 = vpack.c.b16 %v1915, %v1913
        %v2000 = vpack.c.b16 %v1916, %v1914
        %v2001 = vpack.c.b16 %v1919, %v1917
        %v2002 = vpack.c.b16 %v1920, %v1918
        %v2003 = vpack.c.b16 %v1923, %v1921
        %v2004 = vpack.c.b16 %v1924, %v1922
        %v2005 = vpack.c.b16 %v1927, %v1925
        %v2006 = vpack.c.b16 %v1928, %v1926
        %v2007 = vpack.c.b16 %v1931, %v1929
        %v2008 = vpack.c.b16 %v1932, %v1930
        %v2009 = vpack.c.b16 %v1935, %v1933
        %v2010 = vpack.c.b16 %v1936, %v1934
        %v2011 = vpack.c.b16 %v1939, %v1937
        %v2012 = vpack.c.b16 %v1940, %v1938
        %v2013 = vpack.c.b16 %v1943, %v1941
        %v2014 = vpack.c.b16 %v1944, %v1942
        %v2015 = vpack.c.b16 %v1947, %v1945
        %v2016 = vpack.c.b16 %v1948, %v1946
        %v2017 = vpack.c.b16 %v1951, %v1949
        %v2018 = vpack.c.b16 %v1952, %v1950
        %v2019 = vpack.c.b16 %v1955, %v1953
        %v2020 = vpack.c.b16 %v1956, %v1954
        %2085 = vmatprep.subr.bf16.mxu0 %v1958
        %2086 = vmatpush1.bf16.msra.mxu0 %v1957
        %2087 = vmatprep.subr.bf16.mxu0 %v1960
        %2088 = vmatpush1.bf16.msra.mxu0 %v1959
        %2089 = vmatprep.subr.bf16.mxu0 %v1962
        %2090 = vmatpush1.bf16.msra.mxu0 %v1961
        %2091 = vmatprep.subr.bf16.mxu0 %v1964
        %2092 = vmatpush1.bf16.msra.mxu0 %v1963
        %2093 = vmatprep.subr.bf16.mxu0 %v1966
        %2094 = vmatpush1.bf16.msra.mxu0 %v1965
        %2095 = vmatprep.subr.bf16.mxu0 %v1968
        %2096 = vmatpush1.bf16.msra.mxu0 %v1967
        %2097 = vmatprep.subr.bf16.mxu0 %v1970
        %2098 = vmatpush1.bf16.msra.mxu0 %v1969
        %2099 = vmatprep.subr.bf16.mxu0 %v1972
        %2100 = vmatpush1.bf16.msra.mxu0 %v1971
        %2101 = vmatprep.subr.bf16.mxu0 %v1974
        %2102 = vmatpush1.bf16.msra.mxu0 %v1973
        %2103 = vmatprep.subr.bf16.mxu0 %v1976
        %2104 = vmatpush1.bf16.msra.mxu0 %v1975
        %2105 = vmatprep.subr.bf16.mxu0 %v1978
        %2106 = vmatpush1.bf16.msra.mxu0 %v1977
        %2107 = vmatprep.subr.bf16.mxu0 %v1980
        %2108 = vmatpush1.bf16.msra.mxu0 %v1979
        %2109 = vmatprep.subr.bf16.mxu0 %v1982
        %2110 = vmatpush1.bf16.msra.mxu0 %v1981
        %2111 = vmatprep.subr.bf16.mxu0 %v1984
        %2112 = vmatpush1.bf16.msra.mxu0 %v1983
        %2113 = vmatprep.subr.bf16.mxu0 %v1986
        %2114 = vmatpush1.bf16.msra.mxu0 %v1985
        %2115 = vmatprep.subr.bf16.mxu0 %v1988
        %2116 = vmatpush1.bf16.msra.mxu0 %v1987
        %2117 = vmatprep.mubr.bf16.mxu0 %v1698
        %2118 = vmatmul.mubr.bf16.gmra.mrb[0].mxu0 %v1697
        %v2119 = vpop.f32.mrb[0].mxu0
        %v2120 = vadd.f32 0.0, %v2119
        %v2121 = vpop.f32.mrb[0].mxu0
        %v2122 = vadd.f32 0.0, %v2121
        %v2123 = vpop.f32.mrb[0].mxu0
        %v2124 = vpop.f32.mrb[0].mxu0
        %2125 = vdwg.mxu0
        %2126 = vmatprep.subr.bf16.mxu0 %v1990
        %2127 = vmatpush1.bf16.msra.mxu0 %v1989
        %2128 = vmatprep.subr.bf16.mxu0 %v1992
        %2129 = vmatpush1.bf16.msra.mxu0 %v1991
        %2130 = vmatprep.subr.bf16.mxu0 %v1994
        %2131 = vmatpush1.bf16.msra.mxu0 %v1993
        %2132 = vmatprep.subr.bf16.mxu0 %v1996
        %2133 = vmatpush1.bf16.msra.mxu0 %v1995
        %2134 = vmatprep.subr.bf16.mxu0 %v1998
        %2135 = vmatpush1.bf16.msra.mxu0 %v1997
        %2136 = vmatprep.subr.bf16.mxu0 %v2000
        %2137 = vmatpush1.bf16.msra.mxu0 %v1999
        %2138 = vmatprep.subr.bf16.mxu0 %v2002
        %2139 = vmatpush1.bf16.msra.mxu0 %v2001
        %2140 = vmatprep.subr.bf16.mxu0 %v2004
        %2141 = vmatpush1.bf16.msra.mxu0 %v2003
        %2142 = vmatprep.subr.bf16.mxu0 %v2006
        %2143 = vmatpush1.bf16.msra.mxu0 %v2005
        %2144 = vmatprep.subr.bf16.mxu0 %v2008
        %2145 = vmatpush1.bf16.msra.mxu0 %v2007
        %2146 = vmatprep.subr.bf16.mxu0 %v2010
        %2147 = vmatpush1.bf16.msra.mxu0 %v2009
        %2148 = vmatprep.subr.bf16.mxu0 %v2012
        %2149 = vmatpush1.bf16.msra.mxu0 %v2011
        %2150 = vmatprep.subr.bf16.mxu0 %v2014
        %2151 = vmatpush1.bf16.msra.mxu0 %v2013
        %2152 = vmatprep.subr.bf16.mxu0 %v2016
        %2153 = vmatpush1.bf16.msra.mxu0 %v2015
        %2154 = vmatprep.subr.bf16.mxu0 %v2018
        %2155 = vmatpush1.bf16.msra.mxu0 %v2017
        %2156 = vmatprep.subr.bf16.mxu0 %v2020
        %2157 = vmatpush1.bf16.msra.mxu0 %v2019
        %2158 = vmatprep.mubr.bf16.mxu0 %v1700
        %2159 = vmatmul.mubr.bf16.gmra.mrb[0].mxu0 %v1699
        %v2160 = vpop.f32.mrb[0].mxu0
        %v2161 = vadd.f32 %v2120, %v2160
        %v2162 = vpop.f32.mrb[0].mxu0
        %v2163 = vadd.f32 %v2122, %v2162
        %v2164 = vpop.f32.mrb[0].mxu0
        %v2165 = vpop.f32.mrb[0].mxu0
        %2166 = vdwg.mxu0
        %v2167 = vadd.f32 %v1695, %v2161
        %v2168 = vadd.f32 %v1696, %v2163
        %2169 = vst [vmem:[%s9] sm:$0xff] %v2167
        %2170 = vst [vmem:[%s9 + $0x8] sm:$0xff] %v2168
        %s2171 = smul.u32 %s27, 4
        %s2172 = smul.addr %s2171, 8
        %s2173 = scalar_lea.vmem %s10, %s2172
        %2174 = vst [vmem:[%s2173] sm:$0xff] %v1688
        %2175 = vst [vmem:[%s2173 + $0x8] sm:$0xff] %v1690
        %2176 = vst [vmem:[%s2173 + $0x10] sm:$0xff] %v1692
        %2177 = vst [vmem:[%s2173 + $0x18] sm:$0xff] %v1694
        %p2178 = scmp.eq.s32.totalorder %s27, 3
        // Predicated region
        $region81: #{network_forward.1} parent=55 // pred_check
          %p2179 = pneg %p2178
        $region82: #{network_forward.1} parent=55 // pred_check_branch
          %2181 = sbr.rel (%p2179) target = $region84
        $region83: #{network_forward.1} parent=55 // pred_region
          %v2182 = vld [vmem:[%s9] sm:$0xff]
          %v2183 = vrcp.pop %v2182
          %v2184 = vmul.f32 1.0, %v2183
          %v2185 = vld [vmem:[%s10] sm:$0xff]
          %v2186 = vld [vmem:[%s10 + $0x8] sm:$0xff]
          %v2187 = vld [vmem:[%s10 + $0x10] sm:$0xff]
          %v2188 = vld [vmem:[%s10 + $0x18] sm:$0xff]
          %v2189 = vld [vmem:[%s10 + $0x20] sm:$0xff]
          %v2190 = vld [vmem:[%s10 + $0x28] sm:$0xff]
          %v2191 = vld [vmem:[%s10 + $0x30] sm:$0xff]
          %v2192 = vld [vmem:[%s10 + $0x38] sm:$0xff]
          %v2193 = vld [vmem:[%s10 + $0x40] sm:$0xff]
          %v2194 = vld [vmem:[%s10 + $0x48] sm:$0xff]
          %v2195 = vld [vmem:[%s10 + $0x50] sm:$0xff]
          %v2196 = vld [vmem:[%s10 + $0x58] sm:$0xff]
          %v2197 = vld [vmem:[%s10 + $0x60] sm:$0xff]
          %v2198 = vld [vmem:[%s10 + $0x68] sm:$0xff]
          %v2199 = vld [vmem:[%s10 + $0x70] sm:$0xff]
          %v2200 = vld [vmem:[%s10 + $0x78] sm:$0xff]
          %2202 = vset.pattern.permute.xlu0 0
          %2203 = vperm.xlu0 %2202, %v2184
          %v2204 = vpop.permute.xlu0 %2203
          %v2206 = vmul.f32 %v2185, %v2204
          %v2207 = vmul.f32 %v2186, %v2204
          %v2208 = vmul.f32 %v2187, %v2204
          %v2209 = vmul.f32 %v2188, %v2204
          %v2210 = vmul.f32 %v2189, %v2204
          %v2211 = vmul.f32 %v2190, %v2204
          %v2212 = vmul.f32 %v2191, %v2204
          %v2213 = vmul.f32 %v2192, %v2204
          %v2214 = vmul.f32 %v2193, %v2204
          %v2215 = vmul.f32 %v2194, %v2204
          %v2216 = vmul.f32 %v2195, %v2204
          %v2217 = vmul.f32 %v2196, %v2204
          %v2218 = vmul.f32 %v2197, %v2204
          %v2219 = vmul.f32 %v2198, %v2204
          %v2220 = vmul.f32 %v2199, %v2204
          %v2221 = vmul.f32 %v2200, %v2204
          %2222 = vst [vmem:[%s10] sm:$0xff] %v2206
          %2223 = vst [vmem:[%s10 + $0x8] sm:$0xff] %v2207
          %2224 = vst [vmem:[%s10 + $0x10] sm:$0xff] %v2208
          %2225 = vst [vmem:[%s10 + $0x18] sm:$0xff] %v2209
          %2226 = vst [vmem:[%s10 + $0x20] sm:$0xff] %v2210
          %2227 = vst [vmem:[%s10 + $0x28] sm:$0xff] %v2211
          %2228 = vst [vmem:[%s10 + $0x30] sm:$0xff] %v2212
          %2229 = vst [vmem:[%s10 + $0x38] sm:$0xff] %v2213
          %2230 = vst [vmem:[%s10 + $0x40] sm:$0xff] %v2214
          %2231 = vst [vmem:[%s10 + $0x48] sm:$0xff] %v2215
          %2232 = vst [vmem:[%s10 + $0x50] sm:$0xff] %v2216
          %2233 = vst [vmem:[%s10 + $0x58] sm:$0xff] %v2217
          %2234 = vst [vmem:[%s10 + $0x60] sm:$0xff] %v2218
          %2235 = vst [vmem:[%s10 + $0x68] sm:$0xff] %v2219
          %2236 = vst [vmem:[%s10 + $0x70] sm:$0xff] %v2220
          %2237 = vst [vmem:[%s10 + $0x78] sm:$0xff] %v2221
          %v2238 = vld [vmem:[%s9] sm:$0xff]
          %v2239 = vld [vmem:[%s9 + $0x8] sm:$0xff]
          %v2240 = vmul.f32 %v2238, %v2204
          %v2241 = vmul.f32 %v2239, %v2204
          %2242 = vst [vmem:[%s9] sm:$0xff] %v2240
          %2243 = vst [vmem:[%s9 + $0x8] sm:$0xff] %v2241
        $region84: #{network_forward.1} parent=55 // pred_fallthru
          _
        // Predicated region
        $region85: #{network_forward.1} parent=55 // pred_check
          %p2244 = pneg %p239
        $region86: #{network_forward.1} parent=55 // pred_check_branch
          %2246 = sbr.rel (%p2244) target = $region88
        $region87: #{network_forward.1} parent=55 // pred_region
          _
        $region88: #{network_forward.1} parent=55 // pred_fallthru
          _
        // Predicated region
        $region89: #{network_forward.1} parent=55 // pred_check
          %p2247 = pneg %p260
        $region90: #{network_forward.1} parent=55 // pred_check_branch
          %2249 = sbr.rel (%p2247) target = $region92
        $region91: #{network_forward.1} parent=55 // pred_region
          _
        $region92: #{network_forward.1} parent=55 // pred_fallthru
          _
        // Predicated region
        $region93: #{network_forward.1} parent=55 // pred_check
          %p2250 = pneg %p239
        $region94: #{network_forward.1} parent=55 // pred_check_branch
          %2252 = sbr.rel (%p2250) target = $region96
        $region95: #{network_forward.1} parent=55 // pred_region
          _
        $region96: #{network_forward.1} parent=55 // pred_fallthru
          _
        // Predicated region
        $region97: #{network_forward.1} parent=55 // pred_check
          %p2253 = pneg %p260
        $region98: #{network_forward.1} parent=55 // pred_check_branch
          %2255 = sbr.rel (%p2253) target = $region100
        $region99: #{network_forward.1} parent=55 // pred_region
          _
        $region100: #{network_forward.1} parent=55 // pred_fallthru
          _
      $region56: #{network_forward.1} parent=5 // pred_fallthru
        _
      %p2256 = scmp.le.s32.totalorder 2, %s22
      // Predicated region
      $region101: #{network_forward.1} parent=5 // pred_check
        %p2257 = pneg %p2256
      $region102: #{network_forward.1} parent=5 // pred_check_branch
        %2259 = sbr.rel (%p2257) target = $region104
      $region103: #{network_forward.1} parent=5 // pred_region
        %s2260 = ssub.s32 %s22, 2
      $region104: #{network_forward.1} parent=5 // pred_fallthru
        _
    $region6: #{network_forward.1} parent=1 // loop_footer
      %s26 = sadd.s32 1, %s22
    $region7: #{network_forward.1} parent=1 // loop_footer_branch
      %21 = sbr.rel target = $region3
    $region8: #{network_forward.1} parent=1 // loop_exit
      _
    %2261 = vsyncpa [#allocation4], 1
    %s2262 = scalar_lea.sflag [#allocation4], 1
    %2263 = vsyncpa %s2262, 1
    %2264 = vsyncpa [#allocation6], 1
    %2265 = vsyncpa [#allocation9], 1
    %s2266 = scalar_lea.sflag [#allocation9], 1
    %2267 = vsyncpa %s2266, 1

</llo_original>
